<compile_context>
chip_gen: v6e
topology: v6e:2x2x1
jax: 0.10.0
libtpu: 0.0.40
codegen_flags: <defaults>
</compile_context>

<pallas_src>
import functools

import jax
import jax.numpy as jnp
from jax.experimental import pallas as pl
from jax.experimental.pallas import tpu as pltpu


def _round_up(v, m):
    return (v + m - 1) // m * m


# ---------------- kernel 1: A_hat pass + global stats + coefficient finalize ----------------
def _gcn_stats_kernel(xw_ref, a_ref, b_ref, w2_ref, b2_ref,        # inputs
                      q_ref, m_ref, s_ref, coefs_ref,              # outputs
                      tsum_ref,                                    # VMEM scratch
                      *, block_m, n_valid, n_nodes, cr):
    i = pl.program_id(0)

    @pl.when(i == 0)
    def _init():
        tsum_ref[...] = jnp.zeros_like(tsum_ref)
        m_ref[...] = jnp.full_like(m_ref, -1e30)
        s_ref[...] = jnp.zeros_like(s_ref)

    # Fused GCN pass for this row tile: h = A_tile @ (X @ [W1|wp]) + [b1|bp]
    # (XW hoisted to the wrapper; operands may be bf16, accumulation is f32.)
    h = jnp.dot(a_ref[...], xw_ref[...],
                preferred_element_type=jnp.float32) + b_ref[...]          # (bm, Cpad)

    # mask of real (non-padded) graph nodes inside this tile
    row = i * block_m + jax.lax.broadcasted_iota(jnp.int32, (block_m, 1), 0)
    valid = row < n_valid                                                 # (bm, 1)

    # theta branch: masked node-sum of the fc1 output (mean/relu/fc2 in finalize)
    tsum_ref[...] += jnp.sum(jnp.where(valid, h, 0.0), axis=0, keepdims=True)

    # pos branch: scaled scores + online (max, sum-exp) softmax statistics
    q = jnp.where(valid, h[:, cr:cr + 1] * 0.1, -1e30)                    # (bm, 1)
    q_ref[...] = q
    m_old = m_ref[...]
    m_new = jnp.maximum(m_old, jnp.max(q, axis=0, keepdims=True))
    s_ref[...] = (s_ref[...] * jnp.exp(m_old - m_new)
                  + jnp.sum(jnp.exp(q - m_new), axis=0, keepdims=True))
    m_ref[...] = m_new

    # finalize (last tile only): theta = relu(mean); coefs = tanh(fc2(theta)/2).
    # Computed once per forward instead of once per apply tile (review feedback);
    # padded theta columns are killed by the fc2 weight's zero rows.
    @pl.when(i == pl.num_programs(0) - 1)
    def _finalize():
        theta = jnp.maximum(tsum_ref[...] * (1.0 / n_nodes), 0.0)         # (1, Cpad)
        z = jnp.dot(theta, w2_ref[...],
                    preferred_element_type=jnp.float32) + b2_ref[...]
        coefs_ref[...] = jnp.tanh(0.5 * z)        # == 2*sigmoid(z) - 1, (1, 2k*Cpad)


# ---------------- kernel 2: dynamic-ReLU apply (parallel over row tiles) ----------------
def _apply_kernel(x_ref, q_ref, m_ref, s_ref, coefs_ref, o_ref, *, k, n_nodes, cpad):
    coefs = coefs_ref[...]                                                # (1, 2k*Cpad)

    # pos = min(softmax(q)_i * N/3, 1) with the globally-reduced (m, s).
    # Exact reciprocal (correctness feedback): one (1,1) divide, negligible cost.
    e = jnp.exp(q_ref[...] - m_ref[...])                                  # (bm2, 1)
    pos = jnp.minimum(e * (1.0 / s_ref[...]) * (n_nodes / 3.0), 1.0)      # (bm2, 1)

    x = x_ref[...]                                                        # (bm2, Cpad)
    pos_b = jnp.broadcast_to(pos, x.shape)                                # hoisted broadcast

    result = None
    for j in range(k):
        slope = coefs[:, j * cpad:(j + 1) * cpad]                         # lambda = 1.0
        inter = coefs[:, (j + k) * cpad:(j + k + 1) * cpad]               # lambda = 0.5
        a_j = pos_b * slope + (1.0 if j == 0 else 0.0)                    # + init_v
        b_j = pos_b * (0.5 * inter)
        cand = x * a_j + b_j
        result = cand if result is None else jnp.maximum(result, cand)
    o_ref[...] = result.astype(o_ref.dtype)


# ---------------- wrapper ----------------
def dyreluc_forward(x, a_hat, params, *, k=2, block_m=None, block_m_apply=None,
                    a_dtype=jnp.bfloat16, out_dtype=None):
    n, c = x.shape
    cr = params["w1"].shape[1]
    f32 = jnp.float32
    out_dt = f32 if out_dtype is None else out_dtype
    cpad = max(128, _round_up(c, 128))          # lane-dense channel padding
    a_bytes = jnp.dtype(a_dtype).itemsize
    o_bytes = jnp.dtype(out_dt).itemsize
    hp = jax.lax.Precision.HIGHEST

    # ---- generation-dependent VMEM budgets (v5e/v6e: 128 MiB phys, v7x: 64 MiB) ----
    try:
        vmem_cap = int(pltpu.get_tpu_info().vmem_capacity_bytes)
    except Exception:
        vmem_cap = 64 * 1024 * 1024             # conservative fallback (v7x-sized)
    if vmem_cap >= 128 * 1024 * 1024:           # v5e / v6e
        budget, vmem_limit, bm_cap = 80 << 20, 100 << 20, 1024
    else:                                       # v7x (64 MiB per TensorCore)
        budget, vmem_limit, bm_cap = 36 << 20, 48 << 20, 512

    # ---- kernel-1 row tile: count what is actually allocated (review feedback) ----
    def _need1(bm_):
        npad_ = _round_up(n, bm_)
        return (2 * bm_ * npad_ * a_bytes            # A_hat tile, double-buffered
                + npad_ * cpad * a_bytes             # resident XW (single-buffered)
                + cpad * (2 * k * cpad) * 4          # resident fc2 weight
                + 2 * bm_ * 128 * 4                  # q output tile (lane-padded)
                + (1 << 20))                         # bias / accumulators / headroom

    if block_m is None:
        bm = min(bm_cap, _round_up(n, 8))
        while bm > 8 and _need1(bm) > budget:
            bm = max(8, _round_up(bm // 2, 8))
    else:
        assert block_m % 8 == 0
        bm = block_m
    npad = _round_up(n, bm)
    ntiles = npad // bm

    # ---- kernel-2 row tile: decoupled from the A_hat-constrained bm (review feedback) ----
    def _need2(bm2_):
        return (2 * bm2_ * cpad * 4                  # X tile, double-buffered
                + 2 * bm2_ * cpad * o_bytes          # output tile, double-buffered
                + 2 * bm2_ * 128 * 4                 # q tile
                + (1 << 20))                         # coefs / m / s / headroom

    if block_m_apply is None:
        bm2 = bm
        for d in range(1, ntiles + 1):
            if ntiles % d:
                continue
            cand = bm * d
            if cand > 2048:
                break
            if _need2(cand) <= budget:
                bm2 = cand
    else:
        assert block_m_apply % 8 == 0 and npad % block_m_apply == 0
        bm2 = block_m_apply
    ntiles2 = npad // bm2

    # ---- padded / fused parameter layout (layout plumbing only, done once) ----
    xp = jnp.zeros((npad, cpad), f32).at[:n, :c].set(x.astype(f32))
    ap = jnp.zeros((npad, npad), f32).at[:n, :n].set(a_hat.astype(f32)).astype(a_dtype)

    # stacked GCN weight [W1 | wp | 0] and bias [b1 | bp | 0]
    ws = (jnp.zeros((cpad, cpad), f32)
          .at[:c, :cr].set(params["w1"].astype(f32))
          .at[:c, cr:cr + 1].set(params["wp"].astype(f32)))
    bs = (jnp.zeros((1, cpad), f32)
          .at[0, :cr].set(params["b1"].astype(f32))
          .at[0, cr].set(params["bp"].astype(f32)[0]))

    # hoisted X @ [W1 | wp] (tiny matmul; removes kernel-1 step-0 serialization and
    # the resident X / XW scratch -- review feedback)
    xw = jnp.matmul(xp, ws, precision=hp).astype(a_dtype)                 # (npad, Cpad)

    # fc2 regrouped so branch slot t of every channel lives in lane block t*cpad..(t+1)*cpad
    w2 = params["w2"].astype(f32)                                         # (2k*C, Cr), row = ch*2k + t
    b2 = params["b2"].astype(f32)                                         # (2k*C,)
    w2g = jnp.transpose(w2.reshape(c, 2 * k, cr), (2, 1, 0))              # (Cr, 2k, C)
    w2p = jnp.zeros((cpad, 2 * k * cpad), f32).at[:cr, :].set(
        jnp.zeros((cr, 2 * k, cpad), f32).at[:, :, :c].set(w2g).reshape(cr, 2 * k * cpad))
    b2p = jnp.zeros((2 * k, cpad), f32).at[:, :c].set(
        b2.reshape(c, 2 * k).T).reshape(1, 2 * k * cpad)

    ce1 = pl.CostEstimate(
        flops=int(2 * npad * npad * cpad + 2 * cpad * 2 * k * cpad),
        transcendentals=int(npad + 2 * ntiles + 2 * k * cpad),
        bytes_accessed=int(a_bytes * (npad * npad + npad * cpad)
                           + 4 * (cpad * 2 * k * cpad + npad + 8 * cpad)))
    ce2 = pl.CostEstimate(
        flops=int((6 * k + 6) * npad * cpad),
        transcendentals=int(npad),
        bytes_accessed=int((4 + o_bytes) * npad * cpad + 4 * npad + 4 * 2 * k * cpad))

    gcn_kernel = functools.partial(_gcn_stats_kernel, block_m=bm, n_valid=n,
                                   n_nodes=n, cr=cr)
    apply_kernel = functools.partial(_apply_kernel, k=k, n_nodes=n, cpad=cpad)

    def _run(single_buffer_consts):
        # constant-index blocks: single buffer (default double buffer is wasted VMEM)
        res = dict(pipeline_mode=pl.Buffered(1)) if single_buffer_consts else {}

        # ---- kernel 1: A_hat row-tile pass + global reductions + coefficient finalize ----
        q, m, s, coefs = pl.pallas_call(
            gcn_kernel,
            out_shape=(jax.ShapeDtypeStruct((npad, 1), f32),              # pos scores q
                       jax.ShapeDtypeStruct((1, 1), f32),                 # softmax running max
                       jax.ShapeDtypeStruct((1, 1), f32),                 # softmax running sum-exp
                       jax.ShapeDtypeStruct((1, 2 * k * cpad), f32)),     # relu coefficients
            grid_spec=pltpu.PrefetchScalarGridSpec(
                num_scalar_prefetch=0,
                grid=(ntiles,),
                in_specs=[
                    pl.BlockSpec((npad, cpad), lambda i: (0, 0), **res),          # XW (resident)
                    pl.BlockSpec((bm, npad), lambda i: (i, 0)),                   # A_hat row tile
                    pl.BlockSpec((1, cpad), lambda i: (0, 0), **res),             # [b1|bp]
                    pl.BlockSpec((cpad, 2 * k * cpad), lambda i: (0, 0), **res),  # fc2 weight
                    pl.BlockSpec((1, 2 * k * cpad), lambda i: (0, 0), **res),     # fc2 bias
                ],
                out_specs=(
                    pl.BlockSpec((bm, 1), lambda i: (i, 0)),
                    pl.BlockSpec((1, 1), lambda i: (0, 0)),
                    pl.BlockSpec((1, 1), lambda i: (0, 0)),
                    pl.BlockSpec((1, 2 * k * cpad), lambda i: (0, 0)),
                ),
                scratch_shapes=[pltpu.VMEM((1, cpad), f32)],              # theta node-sum
            ),
            compiler_params=pltpu.CompilerParams(
                dimension_semantics=("arbitrary",),     # cross-tile accumulators -> sequential
                vmem_limit_bytes=vmem_limit),
            cost_estimate=ce1,
        )(xw, ap, bs, w2p, b2p)

        # ---- kernel 2: dynamic-ReLU apply, independent per (larger) row tile ----
        out_pad = pl.pallas_call(
            apply_kernel,
            out_shape=jax.ShapeDtypeStruct((npad, cpad), out_dt),
            grid_spec=pltpu.PrefetchScalarGridSpec(
                num_scalar_prefetch=0,
                grid=(ntiles2,),
                in_specs=[
                    pl.BlockSpec((bm2, cpad), lambda i: (i, 0)),                  # X row tile
                    pl.BlockSpec((bm2, 1), lambda i: (i, 0)),                     # pos scores
                    pl.BlockSpec((1, 1), lambda i: (0, 0), **res),                # softmax max
                    pl.BlockSpec((1, 1), lambda i: (0, 0), **res),                # softmax sum-exp
                    pl.BlockSpec((1, 2 * k * cpad), lambda i: (0, 0), **res),     # relu coefficients
                ],
                out_specs=pl.BlockSpec((bm2, cpad), lambda i: (i, 0)),
            ),
            compiler_params=pltpu.CompilerParams(
                dimension_semantics=("parallel",),      # megacore-shardable on v7x
                vmem_limit_bytes=vmem_limit),
            cost_estimate=ce2,
        )(xp, q, m, s, coefs)
        return out_pad

    try:
        out_pad = _run(True)
    except Exception:
        # pl.Buffered / pipeline_mode unavailable on this jax: default double buffering.
        out_pad = _run(False)

    return out_pad[:n, :c]


# ---------------- plain-JAX glue + reference ----------------
def build_normalized_adj(edge_index, n):
    """Dense A_hat = D^{-1/2}(A + I)D^{-1/2}, matching PyG GCNConv's gcn_norm."""
    row, col = edge_index
    a = jnp.zeros((n, n), jnp.float32).at[col, row].add(1.0)
    a = a + jnp.eye(n, dtype=jnp.float32)                  # add self loops
    deg = jnp.sum(a, axis=1)
    dinv = 1.0 / jnp.sqrt(deg)
    return a * dinv[:, None] * dinv[None, :]


def reference(x, a_hat, w1, b1, w2, b2, wp, bp, k=2):
    """Pure-JAX transcription of the PyTorch forward (for verification)."""
    n, c = x.shape
    hp = jax.lax.Precision.HIGHEST
    theta = jnp.matmul(a_hat, jnp.matmul(x, w1, precision=hp), precision=hp) + b1
    theta = jnp.maximum(jnp.mean(theta, axis=0), 0.0)
    theta = jnp.matmul(theta, w2.T, precision=hp) + b2
    theta = 2.0 * jax.nn.sigmoid(theta) - 1.0
    relu_coefs = theta.reshape(-1, c, 2 * k)                       # (1, C, 2k)
    pos = (jnp.matmul(a_hat, jnp.matmul(x, wp, precision=hp), precision=hp)
           + bp).squeeze() / 10.0                                  # (N,)
    pos = jax.nn.softmax(pos).reshape(-1, 1) * (n / 3.0)
    pos = jnp.minimum(pos, 1.0).reshape(-1, 1, 1)
    lambdas = jnp.array([1.0] * k + [0.5] * k, jnp.float32)
    init_v = jnp.array([1.0] + [0.0] * (2 * k - 1), jnp.float32)
    rc = relu_coefs * pos * lambdas + init_v                       # (N, C, 2k)
    out = x[None, :, :, None] * rc[:, :, :k] + rc[:, :, k:]        # (1, N, C, k)
    return jnp.max(out, axis=-1)[0]                                # (N, C)


if __name__ == "__main__":
    N, C, REDUCTION, K = 40, 8, 4, 2
    CR = C // REDUCTION

    key = jax.random.PRNGKey(0)
    keys = jax.random.split(key, 8)

    x = jax.random.normal(keys[0], (N, C), jnp.float32)

    # deterministic undirected ring graph
    src = jnp.arange(N, dtype=jnp.int32)
    dst = (src + 1) % N
    edge_index = jnp.stack([jnp.concatenate([src, dst]),
                            jnp.concatenate([dst, src])])          # (2, 2N)
    a_hat = build_normalized_adj(edge_index, N)

    # deterministic parameter init (shapes from module __init__, torch layout)
    w1 = jax.random.normal(keys[1], (C, CR), jnp.float32) * 0.5    # GCNConv fc1 weight
    b1 = jax.random.normal(keys[2], (CR,), jnp.float32) * 0.1      # GCNConv fc1 bias
    w2 = jax.random.normal(keys[3], (2 * K * C, CR), jnp.float32) * 0.5  # fc2 (out,in)
    b2 = jax.random.normal(keys[4], (2 * K * C,), jnp.float32) * 0.1
    wp = jax.random.normal(keys[5], (C, 1), jnp.float32) * 0.5     # GCNConv pos weight
    bp = jax.random.normal(keys[6], (1,), jnp.float32) * 0.1       # GCNConv pos bias

    params = dict(w1=w1, b1=b1, w2=w2, b2=b2, wp=wp, bp=bp)
    ref = reference(x, a_hat, w1, b1, w2, b2, wp, bp, k=K)

    # block_m=16 -> 3 kernel-1 row tiles (last one partially padded): exercises the
    # cross-tile accumulators, online softmax, padded-row masking, the kernel-1
    # coefficient finalize, and the decoupled (larger) kernel-2 tile chooser.
    # Default a_dtype=bf16 path: tolerance covers bf16 quantization of A_hat / XW.
    out = dyreluc_forward(x, a_hat, params, k=K, block_m=16)
    out = jax.block_until_ready(out)
    assert out.shape == (N, C)
    assert jnp.allclose(out, ref, atol=2e-2, rtol=2e-2), "bf16-A path mismatch vs reference"

    # f32 A_hat path (exact reciprocal softmax): tight tolerance vs the reference.
    out32 = dyreluc_forward(x, a_hat, params, k=K, block_m=16, a_dtype=jnp.float32)
    out32 = jax.block_until_ready(out32)
    assert jnp.allclose(out32, ref, atol=2e-3, rtol=2e-3), "f32-A path mismatch vs reference"

    print("KERNEL_OK")
</pallas_src>

<mosaic_0001>
module attributes {stable_mosaic.version = 11 : i64} {
  func.func @_gcn_stats_kernel(%arg0: i32, %arg1: memref<48x128xbf16, #tpu.memory_space<vmem>>, %arg2: memref<16x48xbf16, #tpu.memory_space<vmem>>, %arg3: memref<1x128xf32, #tpu.memory_space<vmem>>, %arg4: memref<128x512xf32, #tpu.memory_space<vmem>>, %arg5: memref<1x512xf32, #tpu.memory_space<vmem>>, %arg6: memref<16x1xf32, #tpu.memory_space<vmem>>, %arg7: memref<1x1xf32, #tpu.memory_space<vmem>>, %arg8: memref<1x1xf32, #tpu.memory_space<vmem>>, %arg9: memref<1x512xf32, #tpu.memory_space<vmem>>, %arg10: memref<1x128xf32, #tpu.memory_space<vmem>>) attributes {dimension_semantics = [#tpu.dimension_semantics<arbitrary>], iteration_bounds = array<i64: 3>, scalar_prefetch = 0 : i64, scratch_operands = 1 : i64, tpu.core_type = #tpu.core_type<tc>, window_params = [{pipeline_mode = #tpu.pipeline_mode<synchronous>, transform_indices = @transform_0, window_bounds = array<i64: 48, 128>}, {transform_indices = @transform_1, window_bounds = array<i64: 16, 48>}, {pipeline_mode = #tpu.pipeline_mode<synchronous>, transform_indices = @transform_2, window_bounds = array<i64: 1, 128>}, {pipeline_mode = #tpu.pipeline_mode<synchronous>, transform_indices = @transform_3, window_bounds = array<i64: 128, 512>}, {pipeline_mode = #tpu.pipeline_mode<synchronous>, transform_indices = @transform_4, window_bounds = array<i64: 1, 512>}, {transform_indices = @transform_5, window_bounds = array<i64: 16, 1>}, {pipeline_mode = #tpu.pipeline_mode<synchronous>, transform_indices = @transform_6, window_bounds = array<i64: 1, 1>}, {pipeline_mode = #tpu.pipeline_mode<synchronous>, transform_indices = @transform_7, window_bounds = array<i64: 1, 1>}, {pipeline_mode = #tpu.pipeline_mode<synchronous>, transform_indices = @transform_8, window_bounds = array<i64: 1, 512>}]} {
    %c0_i32 = arith.constant 0 : i32
    %0 = arith.cmpi eq, %arg0, %c0_i32 : i32
    %1 = arith.extui %0 : i1 to i32
    %c0_i32_0 = arith.constant 0 : i32
    %2 = arith.cmpi ne, %1, %c0_i32_0 : i32
    scf.if %2 {
      %cst_27 = arith.constant 0.000000e+00 : f32
      %49 = vector.broadcast %cst_27 : f32 to vector<1x128xf32>
      %c0_28 = arith.constant 0 : index
      %c0_29 = arith.constant 0 : index
      %50 = vector.load %arg10[%c0_28, %c0_29] : memref<1x128xf32, #tpu.memory_space<vmem>>, vector<1x128xf32>
      tpu.vector_store %arg10[%c0_28, %c0_29], %49 {strides = array<i32>} : memref<1x128xf32, #tpu.memory_space<vmem>>, vector<1x128xf32>,
      %cst_30 = arith.constant -1.000000e+30 : f32
      %51 = vector.broadcast %cst_30 : f32 to vector<1x1xf32>
      %c0_31 = arith.constant 0 : index
      %c0_32 = arith.constant 0 : index
      %52 = vector.load %arg7[%c0_31, %c0_32] : memref<1x1xf32, #tpu.memory_space<vmem>>, vector<1x1xf32>
      tpu.vector_store %arg7[%c0_31, %c0_32], %51 {strides = array<i32>} : memref<1x1xf32, #tpu.memory_space<vmem>>, vector<1x1xf32>,
      %cst_33 = arith.constant 0.000000e+00 : f32
      %53 = vector.broadcast %cst_33 : f32 to vector<1x1xf32>
      %c0_34 = arith.constant 0 : index
      %c0_35 = arith.constant 0 : index
      %54 = vector.load %arg8[%c0_34, %c0_35] : memref<1x1xf32, #tpu.memory_space<vmem>>, vector<1x1xf32>
      tpu.vector_store %arg8[%c0_34, %c0_35], %53 {strides = array<i32>} : memref<1x1xf32, #tpu.memory_space<vmem>>, vector<1x1xf32>,
    } else {
    }
    %c0 = arith.constant 0 : index
    %c0_1 = arith.constant 0 : index
    %3 = vector.load %arg2[%c0, %c0_1] : memref<16x48xbf16, #tpu.memory_space<vmem>>, vector<16x48xbf16>
    %c0_2 = arith.constant 0 : index
    %c0_3 = arith.constant 0 : index
    %4 = vector.load %arg1[%c0_2, %c0_3] : memref<48x128xbf16, #tpu.memory_space<vmem>>, vector<48x128xbf16>
    %cst = arith.constant dense<0.000000e+00> : vector<16x128xf32>
    %5 = tpu.matmul %3, %4, %cst {dimension_numbers = #tpu.dot_dimension_numbers<[1], [0], [0], [1], [0, 0, 1, 1], [], []>} : vector<16x48xbf16>, vector<48x128xbf16>, vector<16x128xf32> -> vector<16x128xf32>
    %c0_4 = arith.constant 0 : index
    %c0_5 = arith.constant 0 : index
    %6 = vector.load %arg3[%c0_4, %c0_5] : memref<1x128xf32, #tpu.memory_space<vmem>>, vector<1x128xf32>
    %7 = vector.broadcast %6 : vector<1x128xf32> to vector<16x128xf32>
    %8 = arith.addf %5, %7 : vector<16x128xf32>
    %c16_i32 = arith.constant 16 : i32
    %9 = arith.muli %arg0, %c16_i32 : i32
    %10 = tpu.iota {dimensions = array<i32: 0>} : vector<16x1xi32>
    %11 = vector.broadcast %9 : i32 to vector<16x1xi32>
    %12 = arith.addi %11, %10 : vector<16x1xi32>
    %c40_i32 = arith.constant 40 : i32
    %13 = vector.broadcast %c40_i32 : i32 to vector<16x1xi32>
    %14 = arith.cmpi slt, %12, %13 : vector<16x1xi32>
    %c0_6 = arith.constant 0 : index
    %c0_7 = arith.constant 0 : index
    %15 = vector.load %arg10[%c0_6, %c0_7] : memref<1x128xf32, #tpu.memory_space<vmem>>, vector<1x128xf32>
    %cst_8 = arith.constant 0.000000e+00 : f32
    %16 = vector.shape_cast %14 : vector<16x1xi1> to vector<16x1xi1>
    %17 = vector.broadcast %16 : vector<16x1xi1> to vector<16x128xi1>
    %18 = vector.broadcast %cst_8 : f32 to vector<16x128xf32>
    %19 = arith.select %17, %8, %18 : vector<16x128xi1>, vector<16x128xf32>
    %cst_9 = arith.constant dense<0.000000e+00> : vector<128xf32>
    %20 = vector.multi_reduction <add>, %19, %cst_9 [0] : vector<16x128xf32> to vector<128xf32>
    %21 = vector.shape_cast %20 : vector<128xf32> to vector<1x128xf32>
    %22 = arith.addf %15, %21 : vector<1x128xf32>
    %c0_10 = arith.constant 0 : index
    %c0_11 = arith.constant 0 : index
    %23 = vector.load %arg10[%c0_10, %c0_11] : memref<1x128xf32, #tpu.memory_space<vmem>>, vector<1x128xf32>
    tpu.vector_store %arg10[%c0_10, %c0_11], %22 {strides = array<i32>} : memref<1x128xf32, #tpu.memory_space<vmem>>, vector<1x128xf32>,
    %24 = vector.extract_strided_slice %8 {offsets = [0, 2], sizes = [16, 1], strides = [1, 1]} : vector<16x128xf32> to vector<16x1xf32>
    %cst_12 = arith.constant 1.000000e-01 : f32
    %25 = vector.broadcast %cst_12 : f32 to vector<16x1xf32>
    %26 = arith.mulf %24, %25 : vector<16x1xf32>
    %cst_13 = arith.constant -1.000000e+30 : f32
    %27 = vector.broadcast %cst_13 : f32 to vector<16x1xf32>
    %28 = arith.select %14, %26, %27 : vector<16x1xi1>, vector<16x1xf32>
    %c0_14 = arith.constant 0 : index
    %c0_15 = arith.constant 0 : index
    %29 = vector.load %arg6[%c0_14, %c0_15] : memref<16x1xf32, #tpu.memory_space<vmem>>, vector<16x1xf32>
    tpu.vector_store %arg6[%c0_14, %c0_15], %28 {strides = array<i32>} : memref<16x1xf32, #tpu.memory_space<vmem>>, vector<16x1xf32>,
    %c0_16 = arith.constant 0 : index
    %c0_17 = arith.constant 0 : index
    %30 = vector.load %arg7[%c0_16, %c0_17] : memref<1x1xf32, #tpu.memory_space<vmem>>, vector<1x1xf32>
    %cst_18 = arith.constant dense<0xFF800000> : vector<1xf32>
    %31 = vector.multi_reduction <maximumf>, %28, %cst_18 [0] : vector<16x1xf32> to vector<1xf32>
    %32 = vector.shape_cast %31 : vector<1xf32> to vector<1x1xf32>
    %33 = arith.maximumf %30, %32 : vector<1x1xf32>
    %c0_19 = arith.constant 0 : index
    %c0_20 = arith.constant 0 : index
    %34 = vector.load %arg8[%c0_19, %c0_20] : memref<1x1xf32, #tpu.memory_space<vmem>>, vector<1x1xf32>
    %35 = arith.subf %30, %33 : vector<1x1xf32>
    %36 = math.exp %35 : vector<1x1xf32>
    %37 = arith.mulf %34, %36 : vector<1x1xf32>
    %38 = vector.broadcast %33 : vector<1x1xf32> to vector<16x1xf32>
    %39 = arith.subf %28, %38 : vector<16x1xf32>
    %40 = math.exp %39 : vector<16x1xf32>
    %cst_21 = arith.constant dense<0.000000e+00> : vector<1xf32>
    %41 = vector.multi_reduction <add>, %40, %cst_21 [0] : vector<16x1xf32> to vector<1xf32>
    %42 = vector.shape_cast %41 : vector<1xf32> to vector<1x1xf32>
    %43 = arith.addf %37, %42 : vector<1x1xf32>
    %c0_22 = arith.constant 0 : index
    %c0_23 = arith.constant 0 : index
    %44 = vector.load %arg8[%c0_22, %c0_23] : memref<1x1xf32, #tpu.memory_space<vmem>>, vector<1x1xf32>
    tpu.vector_store %arg8[%c0_22, %c0_23], %43 {strides = array<i32>} : memref<1x1xf32, #tpu.memory_space<vmem>>, vector<1x1xf32>,
    %c0_24 = arith.constant 0 : index
    %c0_25 = arith.constant 0 : index
    %45 = vector.load %arg7[%c0_24, %c0_25] : memref<1x1xf32, #tpu.memory_space<vmem>>, vector<1x1xf32>
    tpu.vector_store %arg7[%c0_24, %c0_25], %33 {strides = array<i32>} : memref<1x1xf32, #tpu.memory_space<vmem>>, vector<1x1xf32>,
    %c2_i32 = arith.constant 2 : i32
    %46 = arith.cmpi eq, %arg0, %c2_i32 : i32
    %47 = arith.extui %46 : i1 to i32
    %c0_i32_26 = arith.constant 0 : i32
    %48 = arith.cmpi ne, %47, %c0_i32_26 : i32
    scf.if %48 {
      %c0_27 = arith.constant 0 : index
      %c0_28 = arith.constant 0 : index
      %49 = vector.load %arg10[%c0_27, %c0_28] : memref<1x128xf32, #tpu.memory_space<vmem>>, vector<1x128xf32>
      %cst_29 = arith.constant 2.500000e-02 : f32
      %50 = vector.broadcast %cst_29 : f32 to vector<1x128xf32>
      %51 = arith.mulf %49, %50 : vector<1x128xf32>
      %cst_30 = arith.constant 0.000000e+00 : f32
      %52 = vector.broadcast %cst_30 : f32 to vector<1x128xf32>
      %53 = arith.maximumf %51, %52 : vector<1x128xf32>
      %c0_31 = arith.constant 0 : index
      %c0_32 = arith.constant 0 : index
      %54 = vector.load %arg4[%c0_31, %c0_32] : memref<128x512xf32, #tpu.memory_space<vmem>>, vector<128x512xf32>
      %cst_33 = arith.constant dense<0.000000e+00> : vector<1x512xf32>
      %55 = tpu.matmul %53, %54, %cst_33 {dimension_numbers = #tpu.dot_dimension_numbers<[1], [0], [0], [1], [0, 0, 1, 1], [], []>} : vector<1x128xf32>, vector<128x512xf32>, vector<1x512xf32> -> vector<1x512xf32>
      %c0_34 = arith.constant 0 : index
      %c0_35 = arith.constant 0 : index
      %56 = vector.load %arg5[%c0_34, %c0_35] : memref<1x512xf32, #tpu.memory_space<vmem>>, vector<1x512xf32>
      %57 = arith.addf %55, %56 : vector<1x512xf32>
      %cst_36 = arith.constant 5.000000e-01 : f32
      %58 = vector.broadcast %cst_36 : f32 to vector<1x512xf32>
      %59 = arith.mulf %58, %57 : vector<1x512xf32>
      %60 = math.tanh %59 : vector<1x512xf32>
      %c0_37 = arith.constant 0 : index
      %c0_38 = arith.constant 0 : index
      %61 = vector.load %arg9[%c0_37, %c0_38] : memref<1x512xf32, #tpu.memory_space<vmem>>, vector<1x512xf32>
      tpu.vector_store %arg9[%c0_37, %c0_38], %60 {strides = array<i32>} : memref<1x512xf32, #tpu.memory_space<vmem>>, vector<1x512xf32>,
    } else {
    }
    return
  }
  func.func @transform_0(%arg0: i32) -> (i32, i32) {
    %c0_i32 = arith.constant 0 : i32
    %c0_i32_0 = arith.constant 0 : i32
    %c0_i32_1 = arith.constant 0 : i32
    return %c0_i32, %c0_i32_0 : i32, i32
  }
  func.func @transform_1(%arg0: i32) -> (i32, i32) {
    %c0_i32 = arith.constant 0 : i32
    %c0_i32_0 = arith.constant 0 : i32
    return %arg0, %c0_i32 : i32, i32
  }
  func.func @transform_2(%arg0: i32) -> (i32, i32) {
    %c0_i32 = arith.constant 0 : i32
    %c0_i32_0 = arith.constant 0 : i32
    %c0_i32_1 = arith.constant 0 : i32
    return %c0_i32, %c0_i32_0 : i32, i32
  }
  func.func @transform_3(%arg0: i32) -> (i32, i32) {
    %c0_i32 = arith.constant 0 : i32
    %c0_i32_0 = arith.constant 0 : i32
    %c0_i32_1 = arith.constant 0 : i32
    return %c0_i32, %c0_i32_0 : i32, i32
  }
  func.func @transform_4(%arg0: i32) -> (i32, i32) {
    %c0_i32 = arith.constant 0 : i32
    %c0_i32_0 = arith.constant 0 : i32
    %c0_i32_1 = arith.constant 0 : i32
    return %c0_i32, %c0_i32_0 : i32, i32
  }
  func.func @transform_5(%arg0: i32) -> (i32, i32) {
    %c0_i32 = arith.constant 0 : i32
    %c0_i32_0 = arith.constant 0 : i32
    return %arg0, %c0_i32 : i32, i32
  }
  func.func @transform_6(%arg0: i32) -> (i32, i32) {
    %c0_i32 = arith.constant 0 : i32
    %c0_i32_0 = arith.constant 0 : i32
    %c0_i32_1 = arith.constant 0 : i32
    return %c0_i32, %c0_i32_0 : i32, i32
  }
  func.func @transform_7(%arg0: i32) -> (i32, i32) {
    %c0_i32 = arith.constant 0 : i32
    %c0_i32_0 = arith.constant 0 : i32
    %c0_i32_1 = arith.constant 0 : i32
    return %c0_i32, %c0_i32_0 : i32, i32
  }
  func.func @transform_8(%arg0: i32) -> (i32, i32) {
    %c0_i32 = arith.constant 0 : i32
    %c0_i32_0 = arith.constant 0 : i32
    %c0_i32_1 = arith.constant 0 : i32
    return %c0_i32, %c0_i32_0 : i32, i32
  }
}

module attributes {stable_mosaic.version = 11 : i64} {
  func.func @_gcn_stats_kernel(%arg0: i32, %arg1: memref<48x128xbf16, #tpu.memory_space<vmem>>, %arg2: memref<16x48xbf16, #tpu.memory_space<vmem>>, %arg3: memref<1x128xf32, #tpu.memory_space<vmem>>, %arg4: memref<128x512xf32, #tpu.memory_space<vmem>>, %arg5: memref<1x512xf32, #tpu.memory_space<vmem>>, %arg6: memref<16x1xf32, #tpu.memory_space<vmem>>, %arg7: memref<1x1xf32, #tpu.memory_space<vmem>>, %arg8: memref<1x1xf32, #tpu.memory_space<vmem>>, %arg9: memref<1x512xf32, #tpu.memory_space<vmem>>, %arg10: memref<1x128xf32, #tpu.memory_space<vmem>>) attributes {dimension_semantics = [#tpu.dimension_semantics<arbitrary>], iteration_bounds = array<i64: 3>, scalar_prefetch = 0 : i64, scratch_operands = 1 : i64, tpu.core_type = #tpu.core_type<tc>, window_params = [{pipeline_mode = #tpu.pipeline_mode<synchronous>, transform_indices = @transform_0, window_bounds = array<i64: 48, 128>}, {transform_indices = @transform_1, window_bounds = array<i64: 16, 48>}, {pipeline_mode = #tpu.pipeline_mode<synchronous>, transform_indices = @transform_2, window_bounds = array<i64: 1, 128>}, {pipeline_mode = #tpu.pipeline_mode<synchronous>, transform_indices = @transform_3, window_bounds = array<i64: 128, 512>}, {pipeline_mode = #tpu.pipeline_mode<synchronous>, transform_indices = @transform_4, window_bounds = array<i64: 1, 512>}, {transform_indices = @transform_5, window_bounds = array<i64: 16, 1>}, {pipeline_mode = #tpu.pipeline_mode<synchronous>, transform_indices = @transform_6, window_bounds = array<i64: 1, 1>}, {pipeline_mode = #tpu.pipeline_mode<synchronous>, transform_indices = @transform_7, window_bounds = array<i64: 1, 1>}, {pipeline_mode = #tpu.pipeline_mode<synchronous>, transform_indices = @transform_8, window_bounds = array<i64: 1, 512>}]} {
    %c0_i32 = arith.constant 0 : i32
    %0 = arith.cmpi eq, %arg0, %c0_i32 : i32
    %1 = arith.extui %0 : i1 to i32
    %c0_i32_0 = arith.constant 0 : i32
    %2 = arith.cmpi ne, %1, %c0_i32_0 : i32
    scf.if %2 {
      %cst_27 = arith.constant 0.000000e+00 : f32
      %49 = vector.broadcast %cst_27 : f32 to vector<1x128xf32>
      %c0_28 = arith.constant 0 : index
      %c0_29 = arith.constant 0 : index
      %50 = vector.load %arg10[%c0_28, %c0_29] : memref<1x128xf32, #tpu.memory_space<vmem>>, vector<1x128xf32>
      tpu.vector_store %arg10[%c0_28, %c0_29], %49 {strides = array<i32>} : memref<1x128xf32, #tpu.memory_space<vmem>>, vector<1x128xf32>,
      %cst_30 = arith.constant -1.000000e+30 : f32
      %51 = vector.broadcast %cst_30 : f32 to vector<1x1xf32>
      %c0_31 = arith.constant 0 : index
      %c0_32 = arith.constant 0 : index
      %52 = vector.load %arg7[%c0_31, %c0_32] : memref<1x1xf32, #tpu.memory_space<vmem>>, vector<1x1xf32>
      tpu.vector_store %arg7[%c0_31, %c0_32], %51 {strides = array<i32>} : memref<1x1xf32, #tpu.memory_space<vmem>>, vector<1x1xf32>,
      %cst_33 = arith.constant 0.000000e+00 : f32
      %53 = vector.broadcast %cst_33 : f32 to vector<1x1xf32>
      %c0_34 = arith.constant 0 : index
      %c0_35 = arith.constant 0 : index
      %54 = vector.load %arg8[%c0_34, %c0_35] : memref<1x1xf32, #tpu.memory_space<vmem>>, vector<1x1xf32>
      tpu.vector_store %arg8[%c0_34, %c0_35], %53 {strides = array<i32>} : memref<1x1xf32, #tpu.memory_space<vmem>>, vector<1x1xf32>,
    } else {
    }
    %c0 = arith.constant 0 : index
    %c0_1 = arith.constant 0 : index
    %3 = vector.load %arg2[%c0, %c0_1] : memref<16x48xbf16, #tpu.memory_space<vmem>>, vector<16x48xbf16>
    %c0_2 = arith.constant 0 : index
    %c0_3 = arith.constant 0 : index
    %4 = vector.load %arg1[%c0_2, %c0_3] : memref<48x128xbf16, #tpu.memory_space<vmem>>, vector<48x128xbf16>
    %cst = arith.constant dense<0.000000e+00> : vector<16x128xf32>
    %5 = tpu.matmul %3, %4, %cst {dimension_numbers = #tpu.dot_dimension_numbers<[1], [0], [0], [1], [0, 0, 1, 1], [], []>} : vector<16x48xbf16>, vector<48x128xbf16>, vector<16x128xf32> -> vector<16x128xf32>
    %c0_4 = arith.constant 0 : index
    %c0_5 = arith.constant 0 : index
    %6 = vector.load %arg3[%c0_4, %c0_5] : memref<1x128xf32, #tpu.memory_space<vmem>>, vector<1x128xf32>
    %7 = vector.broadcast %6 : vector<1x128xf32> to vector<16x128xf32>
    %8 = arith.addf %5, %7 : vector<16x128xf32>
    %c16_i32 = arith.constant 16 : i32
    %9 = arith.muli %arg0, %c16_i32 : i32
    %10 = tpu.iota {dimensions = array<i32: 0>} : vector<16x1xi32>
    %11 = vector.broadcast %9 : i32 to vector<16x1xi32>
    %12 = arith.addi %11, %10 : vector<16x1xi32>
    %c40_i32 = arith.constant 40 : i32
    %13 = vector.broadcast %c40_i32 : i32 to vector<16x1xi32>
    %14 = arith.cmpi slt, %12, %13 : vector<16x1xi32>
    %c0_6 = arith.constant 0 : index
    %c0_7 = arith.constant 0 : index
    %15 = vector.load %arg10[%c0_6, %c0_7] : memref<1x128xf32, #tpu.memory_space<vmem>>, vector<1x128xf32>
    %cst_8 = arith.constant 0.000000e+00 : f32
    %16 = vector.shape_cast %14 : vector<16x1xi1> to vector<16x1xi1>
    %17 = vector.broadcast %16 : vector<16x1xi1> to vector<16x128xi1>
    %18 = vector.broadcast %cst_8 : f32 to vector<16x128xf32>
    %19 = arith.select %17, %8, %18 : vector<16x128xi1>, vector<16x128xf32>
    %cst_9 = arith.constant dense<0.000000e+00> : vector<128xf32>
    %20 = vector.multi_reduction <add>, %19, %cst_9 [0] : vector<16x128xf32> to vector<128xf32>
    %21 = vector.shape_cast %20 : vector<128xf32> to vector<1x128xf32>
    %22 = arith.addf %15, %21 : vector<1x128xf32>
    %c0_10 = arith.constant 0 : index
    %c0_11 = arith.constant 0 : index
    %23 = vector.load %arg10[%c0_10, %c0_11] : memref<1x128xf32, #tpu.memory_space<vmem>>, vector<1x128xf32>
    tpu.vector_store %arg10[%c0_10, %c0_11], %22 {strides = array<i32>} : memref<1x128xf32, #tpu.memory_space<vmem>>, vector<1x128xf32>,
    %24 = vector.extract_strided_slice %8 {offsets = [0, 2], sizes = [16, 1], strides = [1, 1]} : vector<16x128xf32> to vector<16x1xf32>
    %cst_12 = arith.constant 1.000000e-01 : f32
    %25 = vector.broadcast %cst_12 : f32 to vector<16x1xf32>
    %26 = arith.mulf %24, %25 : vector<16x1xf32>
    %cst_13 = arith.constant -1.000000e+30 : f32
    %27 = vector.broadcast %cst_13 : f32 to vector<16x1xf32>
    %28 = arith.select %14, %26, %27 : vector<16x1xi1>, vector<16x1xf32>
    %c0_14 = arith.constant 0 : index
    %c0_15 = arith.constant 0 : index
    %29 = vector.load %arg6[%c0_14, %c0_15] : memref<16x1xf32, #tpu.memory_space<vmem>>, vector<16x1xf32>
    tpu.vector_store %arg6[%c0_14, %c0_15], %28 {strides = array<i32>} : memref<16x1xf32, #tpu.memory_space<vmem>>, vector<16x1xf32>,
    %c0_16 = arith.constant 0 : index
    %c0_17 = arith.constant 0 : index
    %30 = vector.load %arg7[%c0_16, %c0_17] : memref<1x1xf32, #tpu.memory_space<vmem>>, vector<1x1xf32>
    %cst_18 = arith.constant dense<0xFF800000> : vector<1xf32>
    %31 = vector.multi_reduction <maximumf>, %28, %cst_18 [0] : vector<16x1xf32> to vector<1xf32>
    %32 = vector.shape_cast %31 : vector<1xf32> to vector<1x1xf32>
    %33 = arith.maximumf %30, %32 : vector<1x1xf32>
    %c0_19 = arith.constant 0 : index
    %c0_20 = arith.constant 0 : index
    %34 = vector.load %arg8[%c0_19, %c0_20] : memref<1x1xf32, #tpu.memory_space<vmem>>, vector<1x1xf32>
    %35 = arith.subf %30, %33 : vector<1x1xf32>
    %36 = math.exp %35 : vector<1x1xf32>
    %37 = arith.mulf %34, %36 : vector<1x1xf32>
    %38 = vector.broadcast %33 : vector<1x1xf32> to vector<16x1xf32>
    %39 = arith.subf %28, %38 : vector<16x1xf32>
    %40 = math.exp %39 : vector<16x1xf32>
    %cst_21 = arith.constant dense<0.000000e+00> : vector<1xf32>
    %41 = vector.multi_reduction <add>, %40, %cst_21 [0] : vector<16x1xf32> to vector<1xf32>
    %42 = vector.shape_cast %41 : vector<1xf32> to vector<1x1xf32>
    %43 = arith.addf %37, %42 : vector<1x1xf32>
    %c0_22 = arith.constant 0 : index
    %c0_23 = arith.constant 0 : index
    %44 = vector.load %arg8[%c0_22, %c0_23] : memref<1x1xf32, #tpu.memory_space<vmem>>, vector<1x1xf32>
    tpu.vector_store %arg8[%c0_22, %c0_23], %43 {strides = array<i32>} : memref<1x1xf32, #tpu.memory_space<vmem>>, vector<1x1xf32>,
    %c0_24 = arith.constant 0 : index
    %c0_25 = arith.constant 0 : index
    %45 = vector.load %arg7[%c0_24, %c0_25] : memref<1x1xf32, #tpu.memory_space<vmem>>, vector<1x1xf32>
    tpu.vector_store %arg7[%c0_24, %c0_25], %33 {strides = array<i32>} : memref<1x1xf32, #tpu.memory_space<vmem>>, vector<1x1xf32>,
    %c2_i32 = arith.constant 2 : i32
    %46 = arith.cmpi eq, %arg0, %c2_i32 : i32
    %47 = arith.extui %46 : i1 to i32
    %c0_i32_26 = arith.constant 0 : i32
    %48 = arith.cmpi ne, %47, %c0_i32_26 : i32
    scf.if %48 {
      %c0_27 = arith.constant 0 : index
      %c0_28 = arith.constant 0 : index
      %49 = vector.load %arg10[%c0_27, %c0_28] : memref<1x128xf32, #tpu.memory_space<vmem>>, vector<1x128xf32>
      %cst_29 = arith.constant 2.500000e-02 : f32
      %50 = vector.broadcast %cst_29 : f32 to vector<1x128xf32>
      %51 = arith.mulf %49, %50 : vector<1x128xf32>
      %cst_30 = arith.constant 0.000000e+00 : f32
      %52 = vector.broadcast %cst_30 : f32 to vector<1x128xf32>
      %53 = arith.maximumf %51, %52 : vector<1x128xf32>
      %c0_31 = arith.constant 0 : index
      %c0_32 = arith.constant 0 : index
      %54 = vector.load %arg4[%c0_31, %c0_32] : memref<128x512xf32, #tpu.memory_space<vmem>>, vector<128x512xf32>
      %cst_33 = arith.constant dense<0.000000e+00> : vector<1x512xf32>
      %55 = tpu.matmul %53, %54, %cst_33 {dimension_numbers = #tpu.dot_dimension_numbers<[1], [0], [0], [1], [0, 0, 1, 1], [], []>} : vector<1x128xf32>, vector<128x512xf32>, vector<1x512xf32> -> vector<1x512xf32>
      %c0_34 = arith.constant 0 : index
      %c0_35 = arith.constant 0 : index
      %56 = vector.load %arg5[%c0_34, %c0_35] : memref<1x512xf32, #tpu.memory_space<vmem>>, vector<1x512xf32>
      %57 = arith.addf %55, %56 : vector<1x512xf32>
      %cst_36 = arith.constant 5.000000e-01 : f32
      %58 = vector.broadcast %cst_36 : f32 to vector<1x512xf32>
      %59 = arith.mulf %58, %57 : vector<1x512xf32>
      %60 = math.tanh %59 : vector<1x512xf32>
      %c0_37 = arith.constant 0 : index
      %c0_38 = arith.constant 0 : index
      %61 = vector.load %arg9[%c0_37, %c0_38] : memref<1x512xf32, #tpu.memory_space<vmem>>, vector<1x512xf32>
      tpu.vector_store %arg9[%c0_37, %c0_38], %60 {strides = array<i32>} : memref<1x512xf32, #tpu.memory_space<vmem>>, vector<1x512xf32>,
    } else {
    }
    return
  }
  func.func @transform_0(%arg0: i32) -> (i32, i32) {
    %c0_i32 = arith.constant 0 : i32
    %c0_i32_0 = arith.constant 0 : i32
    %c0_i32_1 = arith.constant 0 : i32
    return %c0_i32, %c0_i32_0 : i32, i32
  }
  func.func @transform_1(%arg0: i32) -> (i32, i32) {
    %c0_i32 = arith.constant 0 : i32
    %c0_i32_0 = arith.constant 0 : i32
    return %arg0, %c0_i32 : i32, i32
  }
  func.func @transform_2(%arg0: i32) -> (i32, i32) {
    %c0_i32 = arith.constant 0 : i32
    %c0_i32_0 = arith.constant 0 : i32
    %c0_i32_1 = arith.constant 0 : i32
    return %c0_i32, %c0_i32_0 : i32, i32
  }
  func.func @transform_3(%arg0: i32) -> (i32, i32) {
    %c0_i32 = arith.constant 0 : i32
    %c0_i32_0 = arith.constant 0 : i32
    %c0_i32_1 = arith.constant 0 : i32
    return %c0_i32, %c0_i32_0 : i32, i32
  }
  func.func @transform_4(%arg0: i32) -> (i32, i32) {
    %c0_i32 = arith.constant 0 : i32
    %c0_i32_0 = arith.constant 0 : i32
    %c0_i32_1 = arith.constant 0 : i32
    return %c0_i32, %c0_i32_0 : i32, i32
  }
  func.func @transform_5(%arg0: i32) -> (i32, i32) {
    %c0_i32 = arith.constant 0 : i32
    %c0_i32_0 = arith.constant 0 : i32
    return %arg0, %c0_i32 : i32, i32
  }
  func.func @transform_6(%arg0: i32) -> (i32, i32) {
    %c0_i32 = arith.constant 0 : i32
    %c0_i32_0 = arith.constant 0 : i32
    %c0_i32_1 = arith.constant 0 : i32
    return %c0_i32, %c0_i32_0 : i32, i32
  }
  func.func @transform_7(%arg0: i32) -> (i32, i32) {
    %c0_i32 = arith.constant 0 : i32
    %c0_i32_0 = arith.constant 0 : i32
    %c0_i32_1 = arith.constant 0 : i32
    return %c0_i32, %c0_i32_0 : i32, i32
  }
  func.func @transform_8(%arg0: i32) -> (i32, i32) {
    %c0_i32 = arith.constant 0 : i32
    %c0_i32_0 = arith.constant 0 : i32
    %c0_i32_1 = arith.constant 0 : i32
    return %c0_i32, %c0_i32_0 : i32, i32
  }
}

</mosaic_0001>

<llo_original>
// kernel: tpu_custom_call.1
$region0: #{tpu_custom_call.1}
  #allocation0 [shape = 'u32[]', space=smem, size = 0x4, offset = 0x4, fixed_abs, tag = 'smem constant byte address 0x4 - core index']
  #allocation1 [shape = 'u32[144,128]{1,0:T(1,128)}', space=vmem, size = 0x12000, scoped, tag = 'internal scratch']
  #allocation2 [shape = 'f32[1,128]{1,0:T(1,128)}', space=vmem, size = 0x200, scoped, tag = 'scratch operand']
  %s0 = inlined_call_operand.hbm [shape: bf16[48,128], index: 0, kind: input, shape index: {}]
  %s1 = inlined_call_operand.hbm [shape: bf16[48,48], index: 1, kind: input, shape index: {}]
  %s2 = inlined_call_operand.vmem [shape: f32[1,128], index: 2, kind: input, shape index: {}]
  %s3 = inlined_call_operand.hbm [shape: f32[128,512], index: 3, kind: input, shape index: {}]
  %s4 = inlined_call_operand.vmem [shape: f32[1,512], index: 4, kind: input, shape index: {}]
  %s5 = inlined_call_operand.vmem [shape: f32[48,1], index: 5, kind: output, shape index: {0}]
  %s6 = inlined_call_operand.hbm [shape: f32[1,1], index: 6, kind: output, shape index: {1}]
  %s7 = inlined_call_operand.hbm [shape: f32[1,1], index: 7, kind: output, shape index: {2}]
  %s8 = inlined_call_operand.hbm [shape: f32[1,512], index: 8, kind: output, shape index: {3}]
  %9 = xla_tuple %s5, %s6, %s7, %s8
  %s10 = sld [smem:[#allocation0]]
  $region97: #{tpu_custom_call.1} parent=0
    _
  %s12 = ssub.s32 1, %s10
  %s13 = scalar_select 0, %s12, %s10
  $region1: #{tpu_custom_call.1} parent=0
    #allocation3 [shape = 'u8[12288]{0}', space=vmem, size = 0x3000, scoped, tag = 'input window, operand 0, single buffered']
    #allocation4 [shape = 's32[2]{0}', space=sflag, size = 0x8, scoped, tag = 'scoped memory for tpu_custom_call.1']
    #allocation5 [shape = 's32[2]{0}', space=sflag, size = 0x8, scoped, tag = 'scoped memory for tpu_custom_call.1']
    #allocation6 [shape = 'u8[8192]{0}', space=vmem, size = 0x2000, scoped, tag = 'input window, operand 1']
    #allocation7 [shape = 's32[2]{0}', space=sflag, size = 0x8, scoped, tag = 'scoped memory for tpu_custom_call.1']
    #allocation8 [shape = 'u8[262144]{0}', space=vmem, size = 0x40000, scoped, tag = 'input window, operand 3, single buffered']
    #allocation9 [shape = 'u8[512]{0}', space=vmem, size = 0x400, scoped, tag = 'output window, operand 1, single buffered']
    #allocation10 [shape = 'u8[512]{0}', space=vmem, size = 0x400, scoped, tag = 'output window, operand 2, single buffered']
    #allocation11 [shape = 's32[1]{0}', space=sflag, size = 0x4, scoped, tag = 'scoped memory for tpu_custom_call.1']
    #allocation12 [shape = 'u8[2048]{0}', space=vmem, size = 0x800, scoped, tag = 'output window, operand 3, single buffered']
    %14 = vsyncpa [#allocation4], 0
    %15 = vsyncpa [#allocation7], 0
    %s16 = scalar_lea.sflag [#allocation7], 1
    %17 = vsyncpa %s16, 0
    %18 = vsyncpa [#allocation5], 0
    %19 = vsyncpa [#allocation11], 0
    loop: start=0, step=1, limit=5
    $region2: #{tpu_custom_call.1} parent=1 // loop_pre_header
      _
    $region3: #{tpu_custom_call.1} parent=1 // loop_header
      %s21 = sphi 0, %s25
      %p22 = scmp.ge.s32.totalorder %s21, 5
      %s29 = sphi 0, %s29
      %s31 = sphi 0, %s29
      %s32 = sphi 0, %s31
      %s46 = sphi 0, %s32
      %s52 = sphi 0, %s54
      %s55 = sphi 0, %s52
      %s56 = sphi 0, %s55
      %s72 = sphi 0, %s56
      %s76 = sphi 0, %s76
      %s78 = sphi 0, %s76
      %s79 = sphi 0, %s78
      %s93 = sphi 0, %s79
      %s97 = sphi 0, %s97
      %s99 = sphi 0, %s97
      %s100 = sphi 0, %s99
      %s114 = sphi 0, %s100
      %s118 = sphi 0, %s118
      %s120 = sphi 0, %s118
      %s121 = sphi 0, %s120
      %s135 = sphi 0, %s121
      %s141 = sphi 0, %s143
      %s144 = sphi 0, %s141
      %s145 = sphi 0, %s144
      %s161 = sphi 0, %s145
      %s165 = sphi 0, %s165
      %s167 = sphi 0, %s165
      %s168 = sphi 0, %s167
      %s182 = sphi 0, %s168
      %s186 = sphi 0, %s186
      %s188 = sphi 0, %s186
      %s189 = sphi 0, %s188
      %s203 = sphi 0, %s189
      %s207 = sphi 0, %s207
      %s209 = sphi 0, %s207
      %s210 = sphi 0, %s209
      %s224 = sphi 0, %s210
    $region4: #{tpu_custom_call.1} parent=1 // loop_header_branch
      %24 = sbr.rel (%p22) target = $region8
    $region5: #{tpu_custom_call.1} parent=1 // loop_body
      %s26 = ssub.s32 %s21, 1
      %s27 = ssub.s32 %s21, 2
      %s28 = sadd.s32 %s21, 1
      %s30 = sadd.s32 %s29, 1
      %p33 = scmp.eq.s32.totalorder %s21, 2
      %p34 = scmp.ne.s32.totalorder %s29, %s31
      %p35 = scmp.eq.s32.totalorder %s21, 0
      %p36 = por %p34, %p35
      %p37 = scmp.ne.s32.totalorder %s29, %s31
      %p38 = scmp.eq.s32.totalorder %s26, 2
      %p39 = por %p37, %p38
      %p40 = scmp.ne.s32.totalorder %s31, %s32
      %p41 = scmp.eq.s32.totalorder %s26, 0
      %p42 = por %p40, %p41
      %p43 = scmp.ne.s32.totalorder %s31, %s32
      %p44 = scmp.eq.s32.totalorder %s27, 2
      %p45 = por %p43, %p44
      %p47 = scmp.ne.s32.totalorder %s32, %s46
      %p48 = scmp.eq.s32.totalorder %s27, 0
      %p49 = por %p47, %p48
      %s50 = ssub.s32 %s21, %s28
      %p51 = scmp.eq.s32.totalorder %s50, 0
      %s53 = sadd.s32 %s52, 1
      %s54 = scalar_select %p51, %s52, %s53
      %p57 = pneg %p51
      %p58 = scmp.eq.s32.totalorder %s21, 2
      %p59 = por %p57, %p58
      %p60 = scmp.ne.s32.totalorder %s52, %s55
      %p61 = scmp.eq.s32.totalorder %s21, 0
      %p62 = por %p60, %p61
      %p63 = scmp.ne.s32.totalorder %s52, %s55
      %p64 = scmp.eq.s32.totalorder %s26, 2
      %p65 = por %p63, %p64
      %p66 = scmp.ne.s32.totalorder %s55, %s56
      %p67 = scmp.eq.s32.totalorder %s26, 0
      %p68 = por %p66, %p67
      %p69 = scmp.ne.s32.totalorder %s55, %s56
      %p70 = scmp.eq.s32.totalorder %s27, 2
      %p71 = por %p69, %p70
      %p73 = scmp.ne.s32.totalorder %s56, %s72
      %p74 = scmp.eq.s32.totalorder %s27, 0
      %p75 = por %p73, %p74
      %s77 = sadd.s32 %s76, 1
      %p80 = scmp.eq.s32.totalorder %s21, 2
      %p81 = scmp.ne.s32.totalorder %s76, %s78
      %p82 = scmp.eq.s32.totalorder %s21, 0
      %p83 = por %p81, %p82
      %p84 = scmp.ne.s32.totalorder %s76, %s78
      %p85 = scmp.eq.s32.totalorder %s26, 2
      %p86 = por %p84, %p85
      %p87 = scmp.ne.s32.totalorder %s78, %s79
      %p88 = scmp.eq.s32.totalorder %s26, 0
      %p89 = por %p87, %p88
      %p90 = scmp.ne.s32.totalorder %s78, %s79
      %p91 = scmp.eq.s32.totalorder %s27, 2
      %p92 = por %p90, %p91
      %p94 = scmp.ne.s32.totalorder %s79, %s93
      %p95 = scmp.eq.s32.totalorder %s27, 0
      %p96 = por %p94, %p95
      %s98 = sadd.s32 %s97, 1
      %p101 = scmp.eq.s32.totalorder %s21, 2
      %p102 = scmp.ne.s32.totalorder %s97, %s99
      %p103 = scmp.eq.s32.totalorder %s21, 0
      %p104 = por %p102, %p103
      %p105 = scmp.ne.s32.totalorder %s97, %s99
      %p106 = scmp.eq.s32.totalorder %s26, 2
      %p107 = por %p105, %p106
      %p108 = scmp.ne.s32.totalorder %s99, %s100
      %p109 = scmp.eq.s32.totalorder %s26, 0
      %p110 = por %p108, %p109
      %p111 = scmp.ne.s32.totalorder %s99, %s100
      %p112 = scmp.eq.s32.totalorder %s27, 2
      %p113 = por %p111, %p112
      %p115 = scmp.ne.s32.totalorder %s100, %s114
      %p116 = scmp.eq.s32.totalorder %s27, 0
      %p117 = por %p115, %p116
      %s119 = sadd.s32 %s118, 1
      %p122 = scmp.eq.s32.totalorder %s21, 2
      %p123 = scmp.ne.s32.totalorder %s118, %s120
      %p124 = scmp.eq.s32.totalorder %s21, 0
      %p125 = por %p123, %p124
      %p126 = scmp.ne.s32.totalorder %s118, %s120
      %p127 = scmp.eq.s32.totalorder %s26, 2
      %p128 = por %p126, %p127
      %p129 = scmp.ne.s32.totalorder %s120, %s121
      %p130 = scmp.eq.s32.totalorder %s26, 0
      %p131 = por %p129, %p130
      %p132 = scmp.ne.s32.totalorder %s120, %s121
      %p133 = scmp.eq.s32.totalorder %s27, 2
      %p134 = por %p132, %p133
      %p136 = scmp.ne.s32.totalorder %s121, %s135
      %p137 = scmp.eq.s32.totalorder %s27, 0
      %p138 = por %p136, %p137
      %s139 = ssub.s32 %s21, %s28
      %p140 = scmp.eq.s32.totalorder %s139, 0
      %s142 = sadd.s32 %s141, 1
      %s143 = scalar_select %p140, %s141, %s142
      %p146 = pneg %p140
      %p147 = scmp.eq.s32.totalorder %s21, 2
      %p148 = por %p146, %p147
      %p149 = scmp.ne.s32.totalorder %s141, %s144
      %p150 = scmp.eq.s32.totalorder %s21, 0
      %p151 = por %p149, %p150
      %p152 = scmp.ne.s32.totalorder %s141, %s144
      %p153 = scmp.eq.s32.totalorder %s26, 2
      %p154 = por %p152, %p153
      %p155 = scmp.ne.s32.totalorder %s144, %s145
      %p156 = scmp.eq.s32.totalorder %s26, 0
      %p157 = por %p155, %p156
      %p158 = scmp.ne.s32.totalorder %s144, %s145
      %p159 = scmp.eq.s32.totalorder %s27, 2
      %p160 = por %p158, %p159
      %p162 = scmp.ne.s32.totalorder %s145, %s161
      %p163 = scmp.eq.s32.totalorder %s27, 0
      %p164 = por %p162, %p163
      %s166 = sadd.s32 %s165, 1
      %p169 = scmp.eq.s32.totalorder %s21, 2
      %p170 = scmp.ne.s32.totalorder %s165, %s167
      %p171 = scmp.eq.s32.totalorder %s21, 0
      %p172 = por %p170, %p171
      %p173 = scmp.ne.s32.totalorder %s165, %s167
      %p174 = scmp.eq.s32.totalorder %s26, 2
      %p175 = por %p173, %p174
      %p176 = scmp.ne.s32.totalorder %s167, %s168
      %p177 = scmp.eq.s32.totalorder %s26, 0
      %p178 = por %p176, %p177
      %p179 = scmp.ne.s32.totalorder %s167, %s168
      %p180 = scmp.eq.s32.totalorder %s27, 2
      %p181 = por %p179, %p180
      %p183 = scmp.ne.s32.totalorder %s168, %s182
      %p184 = scmp.eq.s32.totalorder %s27, 0
      %p185 = por %p183, %p184
      %s187 = sadd.s32 %s186, 1
      %p190 = scmp.eq.s32.totalorder %s21, 2
      %p191 = scmp.ne.s32.totalorder %s186, %s188
      %p192 = scmp.eq.s32.totalorder %s21, 0
      %p193 = por %p191, %p192
      %p194 = scmp.ne.s32.totalorder %s186, %s188
      %p195 = scmp.eq.s32.totalorder %s26, 2
      %p196 = por %p194, %p195
      %p197 = scmp.ne.s32.totalorder %s188, %s189
      %p198 = scmp.eq.s32.totalorder %s26, 0
      %p199 = por %p197, %p198
      %p200 = scmp.ne.s32.totalorder %s188, %s189
      %p201 = scmp.eq.s32.totalorder %s27, 2
      %p202 = por %p200, %p201
      %p204 = scmp.ne.s32.totalorder %s189, %s203
      %p205 = scmp.eq.s32.totalorder %s27, 0
      %p206 = por %p204, %p205
      %s208 = sadd.s32 %s207, 1
      %p211 = scmp.eq.s32.totalorder %s21, 2
      %p212 = scmp.ne.s32.totalorder %s207, %s209
      %p213 = scmp.eq.s32.totalorder %s21, 0
      %p214 = por %p212, %p213
      %p215 = scmp.ne.s32.totalorder %s207, %s209
      %p216 = scmp.eq.s32.totalorder %s26, 2
      %p217 = por %p215, %p216
      %p218 = scmp.ne.s32.totalorder %s209, %s210
      %p219 = scmp.eq.s32.totalorder %s26, 0
      %p220 = por %p218, %p219
      %p221 = scmp.ne.s32.totalorder %s209, %s210
      %p222 = scmp.eq.s32.totalorder %s27, 2
      %p223 = por %p221, %p222
      %p225 = scmp.ne.s32.totalorder %s210, %s224
      %p226 = scmp.eq.s32.totalorder %s27, 0
      %p227 = por %p225, %p226
      %p228 = scmp.le.s32.totalorder 1, %s21
      %p229 = scmp.lt.s32.totalorder %s21, 4
      %p230 = pnand %p228, %p229
      %p231 = pneg %p230
      // Predicated region
      $region9: #{tpu_custom_call.1} parent=5 // pred_check
        _
      $region10: #{tpu_custom_call.1} parent=5 // pred_check_branch
        %233 = sbr.rel (%p230) target = $region12
      $region11: #{tpu_custom_call.1} parent=5 // pred_region
        %s234 = ssub.s32 %s21, 1
        // Predicated region
        $region13: #{tpu_custom_call.1} parent=11 // pred_check
          %p235 = pneg %p42
        $region14: #{tpu_custom_call.1} parent=11 // pred_check_branch
          %237 = sbr.rel (%p235) target = $region16
        $region15: #{tpu_custom_call.1} parent=11 // pred_region
          %s239 = ssub.s32 384, 384
          %240 = vsyncadd [#allocation4], %s239
          %s241 = sshll.u32 [#allocation3], 4
          %s242 = int_to_ptr.vmem [resolvable:$true] %s241
          %247 = dma.hbm_to_vmem [thread:$0]  %s0, 384, %s242, [#allocation4], 64, 64, 4
        $region16: #{tpu_custom_call.1} parent=11 // pred_fallthru
          _
        // Predicated region
        $region17: #{tpu_custom_call.1} parent=11 // pred_check
          %p248 = pneg %p89
        $region18: #{tpu_custom_call.1} parent=11 // pred_check_branch
          %250 = sbr.rel (%p248) target = $region20
        $region19: #{tpu_custom_call.1} parent=11 // pred_region
          _
        $region20: #{tpu_custom_call.1} parent=11 // pred_fallthru
          _
        // Predicated region
        $region21: #{tpu_custom_call.1} parent=11 // pred_check
          %p251 = pneg %p110
        $region22: #{tpu_custom_call.1} parent=11 // pred_check_branch
          %253 = sbr.rel (%p251) target = $region24
        $region23: #{tpu_custom_call.1} parent=11 // pred_region
          %s255 = ssub.s32 8192, 8192
          %256 = vsyncadd [#allocation7], %s255
          %s257 = sshll.u32 [#allocation8], 4
          %s258 = int_to_ptr.vmem [resolvable:$true] %s257
          %263 = dma.hbm_to_vmem [thread:$0]  %s3, 8192, %s258, [#allocation7], 512, 512, 32
        $region24: #{tpu_custom_call.1} parent=11 // pred_fallthru
          _
        // Predicated region
        $region25: #{tpu_custom_call.1} parent=11 // pred_check
          %p264 = pneg %p131
        $region26: #{tpu_custom_call.1} parent=11 // pred_check_branch
          %266 = sbr.rel (%p264) target = $region28
        $region27: #{tpu_custom_call.1} parent=11 // pred_region
          _
        $region28: #{tpu_custom_call.1} parent=11 // pred_fallthru
          _
      $region12: #{tpu_custom_call.1} parent=5 // pred_fallthru
        _
      %p267 = scmp.lt.s32.totalorder %s21, 3
      // Predicated region
      $region29: #{tpu_custom_call.1} parent=5 // pred_check
        %p268 = pneg %p267
      $region30: #{tpu_custom_call.1} parent=5 // pred_check_branch
        %270 = sbr.rel (%p268) target = $region32
      $region31: #{tpu_custom_call.1} parent=5 // pred_region
        // Predicated region
        $region33: #{tpu_custom_call.1} parent=31 // pred_check
          %p271 = pneg %p62
        $region34: #{tpu_custom_call.1} parent=31 // pred_check_branch
          %273 = sbr.rel (%p271) target = $region36
        $region35: #{tpu_custom_call.1} parent=31 // pred_region
          %s274 = sand.u32 %s21, 1
          %s275 = scalar_lea.sflag [#allocation7], %s274
          %s276 = sand.u32 %s52, 1
          %s277 = smul.addr %s276, 8
          %s278 = scalar_lea.vmem [#allocation6], %s277
          %s279 = smul.u32 2, %s21
          %s281 = ssub.s32 128, 128
          %282 = vsyncadd %s275, %s281
          %s283 = smul.addr %s279, 64
          %s284 = scalar_lea.hbm %s1, %s283
          %s285 = sshll.u32 %s278, 4
          %s286 = int_to_ptr.vmem [resolvable:$true] %s285
          %291 = dma.hbm_to_vmem [thread:$0]  %s284, 128, %s286, %s275, 64, 64, 4
        $region36: #{tpu_custom_call.1} parent=31 // pred_fallthru
          _
      $region32: #{tpu_custom_call.1} parent=5 // pred_fallthru
        _
      %p292 = scmp.le.s32.totalorder 1, %s21
      %p293 = scmp.lt.s32.totalorder %s21, 4
      %p294 = pnand %p292, %p293
      %p295 = pneg %p294
      // Predicated region
      $region37: #{tpu_custom_call.1} parent=5 // pred_check
        _
      $region38: #{tpu_custom_call.1} parent=5 // pred_check_branch
        %297 = sbr.rel (%p294) target = $region40
      $region39: #{tpu_custom_call.1} parent=5 // pred_region
        %s298 = ssub.s32 %s21, 1
        // Predicated region
        $region41: #{tpu_custom_call.1} parent=39 // pred_check
          %p299 = pneg %p42
        $region42: #{tpu_custom_call.1} parent=39 // pred_check_branch
          %301 = sbr.rel (%p299) target = $region44
        $region43: #{tpu_custom_call.1} parent=39 // pred_region
          %302 = dma.done [#allocation4], 384
        $region44: #{tpu_custom_call.1} parent=39 // pred_fallthru
          _
        %s303 = sand.u32 %s26, 1
        %s304 = scalar_lea.sflag [#allocation7], %s303
        %s305 = sand.u32 %s55, 1
        %s306 = smul.addr %s305, 8
        %s307 = scalar_lea.vmem [#allocation6], %s306
        // Predicated region
        $region45: #{tpu_custom_call.1} parent=39 // pred_check
          %p308 = pneg %p68
        $region46: #{tpu_custom_call.1} parent=39 // pred_check_branch
          %310 = sbr.rel (%p308) target = $region48
        $region47: #{tpu_custom_call.1} parent=39 // pred_region
          %311 = dma.done %s304, 128
        $region48: #{tpu_custom_call.1} parent=39 // pred_fallthru
          _
        // Predicated region
        $region49: #{tpu_custom_call.1} parent=39 // pred_check
          %p312 = pneg %p110
        $region50: #{tpu_custom_call.1} parent=39 // pred_check_branch
          %314 = sbr.rel (%p312) target = $region52
        $region51: #{tpu_custom_call.1} parent=39 // pred_region
          %315 = dma.done [#allocation7], 8192
        $region52: #{tpu_custom_call.1} parent=39 // pred_fallthru
          _
        %p316 = pneg %p42
        %p317 = pneg %p39
        %s318 = sand.u32 %s26, 1
        %s319 = scalar_lea.sflag [#allocation7], %s318
        %s320 = sand.u32 %s55, 1
        %s321 = smul.addr %s320, 8
        %s322 = scalar_lea.vmem [#allocation6], %s321
        %p323 = pneg %p68
        %p324 = pneg %p65
        %p325 = pneg %p89
        %p326 = pneg %p86
        %p327 = pneg %p110
        %p328 = pneg %p107
        %p329 = pneg %p131
        %p330 = pneg %p128
        %p331 = pneg %p157
        %p332 = pneg %p154
        %s333 = smul.u32 2, %s26
        %p334 = scmp.lt.s32.totalorder %s333, 5
        %s335 = scalar_select %p334, %s333, 5
        %s336 = smul.addr %s335, 8
        %s337 = scalar_lea.vmem %s5, %s336
        %p338 = pneg %p178
        %p339 = pneg %p175
        %p340 = pneg %p199
        %p341 = pneg %p196
        %p342 = pneg %p220
        %p343 = pneg %p217
        %s344 = smul.u32 2, %s26
        %s345 = smul.u32 2, %s26
        %p346 = scmp.lt.s32.totalorder %s345, 5
        %s347 = scalar_select %p346, %s345, 5
        %s348 = smul.addr %s347, 8
        %s349 = scalar_lea.vmem %s5, %s348
        %s350 = smul.u32 2, %s26
        %p352 = scmp.eq.s32.totalorder %s26, 0
        // Predicated region
        $region53: #{tpu_custom_call.1} parent=39 // pred_check
          %p353 = pneg %p352
        $region54: #{tpu_custom_call.1} parent=39 // pred_check_branch
          %355 = sbr.rel (%p353) target = $region56
        $region55: #{tpu_custom_call.1} parent=39 // pred_region
          %356 = vst [vmem:[#allocation2] sm:$0x1] 0.0
          %vm357 = vcmask 0
          %358 = vst.msk [vmem:[#allocation9] sm:$0x1] %vm357, -1e+30
          %359 = vst.msk [vmem:[#allocation10] sm:$0x1] %vm357, 0.0
        $region56: #{tpu_custom_call.1} parent=39 // pred_fallthru
          _
        %v360 = vld [vmem:[%s307] sm:$0xf]
        %v361 = vld [vmem:[%s307 + $0x4] sm:$0xf]
        %v362 = vld [vmem:[#allocation3] sm:$0xf]
        %v363 = vld [vmem:[#allocation3 + $0x4] sm:$0xf]
        %v364 = vld [vmem:[#allocation3 + $0x8] sm:$0xf]
        %v365 = vld [vmem:[#allocation3 + $0xc] sm:$0xf]
        %v366 = vld [vmem:[#allocation3 + $0x10] sm:$0xf]
        %v367 = vld [vmem:[#allocation3 + $0x14] sm:$0xf]
        %v368 = vld [vmem:[%s2] sm:$0x1]
        %v370 = vlaneseq
        %v371 = vshrl.u32 %v370, 7
        %v372 = vsub.s32 0, %v371
        %v373 = vrot.slane %v368, %v372
        %v377 = vunpack.c.l.b16 %v360
        %v378 = vunpack.c.l.b16 %v361
        %v379 = vpack.c.b16 %v378, %v377
        %v386 = vunpack.c.l.b16 %v362
        %v387 = vunpack.c.l.b16 %v363
        %v388 = vunpack.c.l.b16 %v364
        %v389 = vunpack.c.l.b16 %v365
        %v390 = vunpack.c.l.b16 %v366
        %v391 = vunpack.c.l.b16 %v367
        %v392 = vpack.c.b16 %v387, %v386
        %v393 = vpack.c.b16 %v389, %v388
        %v394 = vpack.c.b16 %v391, %v390
        %vm398 = vcmask 392192
        %v400 = vsel %vm398, %v379, 0
        %402 = vmatprep.subr.bf16.mxu0 0
        %403 = vmatpush1.bf16.msra.mxu0 0
        %404 = vmatprep.subr.bf16.mxu0 0
        %405 = vmatpush1.bf16.msra.mxu0 0
        %406 = vmatprep.subr.bf16.mxu0 0
        %407 = vmatpush1.bf16.msra.mxu0 0
        %408 = vmatprep.subr.bf16.mxu0 0
        %409 = vmatpush1.bf16.msra.mxu0 0
        %410 = vmatprep.subr.bf16.mxu0 0
        %411 = vmatpush1.bf16.msra.mxu0 0
        %412 = vmatprep.subr.bf16.mxu0 0
        %413 = vmatpush1.bf16.msra.mxu0 %v394
        %414 = vmatprep.subr.bf16.mxu0 0
        %415 = vmatpush1.bf16.msra.mxu0 %v393
        %416 = vmatprep.subr.bf16.mxu0 0
        %417 = vmatpush1.bf16.msra.mxu0 %v392
        %418 = vmatprep.subr.bf16.mxu0 0
        %419 = vmatpush2.bf16.msra.mxu0 0
        %420 = vmatprep.subr.bf16.mxu0 0
        %421 = vmatpush2.bf16.msra.mxu0 0
        %422 = vmatprep.subr.bf16.mxu0 0
        %423 = vmatpush2.bf16.msra.mxu0 0
        %424 = vmatprep.subr.bf16.mxu0 0
        %425 = vmatpush2.bf16.msra.mxu0 0
        %426 = vmatprep.subr.bf16.mxu0 0
        %427 = vmatpush2.bf16.msra.mxu0 0
        %428 = vmatprep.subr.bf16.mxu0 0
        %429 = vmatpush2.bf16.msra.mxu0 0
        %430 = vmatprep.subr.bf16.mxu0 0
        %431 = vmatpush2.bf16.msra.mxu0 0
        %432 = vmatprep.subr.bf16.mxu0 0
        %433 = vmatpush2.bf16.msra.mxu0 0
        %434 = vmatprep.mubr.bf16.mxu0 0
        %435 = vmatmul.mubr.bf16.gmra.mxu0 %v400
        %v436 = vpop.f32.mrf.mxu0
        %v437 = vadd.f32 %v373, %v436
        %v438 = vpop.f32.mrf.mxu0
        %v439 = vpop.f32.mrf.mxu0
        %v440 = vadd.f32 %v373, %v439
        %v441 = vpop.f32.mrf.mxu0
        %442 = vdwg.mxu0
        %s443 = smul.u32 %s26, 16
        %v444 = vlaneseq
        %v445 = vshrl.u32 %v444, 7
        %v446 = vadd.s32 %v445, 8
        %v447 = vstv %s443
        %v448 = vadd.s32 %v447, %v445
        %v449 = vadd.s32 %v447, %v446
        %vm450 = vcmp.lt.s32.totalorder %v448, 40
        %vm451 = vcmp.lt.s32.totalorder %v449, 40
        %v452 = vld [vmem:[#allocation2] sm:$0x1]
        %v453 = vsel %vm450, 1, 0
        %v454 = vsel %vm451, 1, 0
        %vm455 = vcmp.eq.s32.totalorder %v453, 1
        %vm456 = vcmp.eq.s32.totalorder %v454, 1
        %v457 = vsel %vm455, %v437, 0.0
        %v458 = vsel %vm456, %v440, 0.0
        %v459 = vadd.f32 %v457, %v458
        %v460 = vrot.slane %v459, 4
        %v461 = vadd.f32 %v459, %v460
        %v462 = vrot.slane %v461, 2
        %v463 = vadd.f32 %v461, %v462
        %v464 = vrot.slane %v463, 1
        %v465 = vadd.f32 %v463, %v464
        %v466 = vadd.f32 %v452, %v465
        %467 = vst [vmem:[#allocation2] sm:$0x1] %v466
        %v468 = vmul.f32 %v437, 0.1
        %v469 = vmul.f32 %v440, 0.1
        %v470 = vsel %vm450, %v468, -1e+30
        %v471 = vsel %vm451, %v469, -1e+30
        %474 = vrot.lane.b32.xlu0 %v470, 126
        %v475 = vpop.permute.xlu0 %474
        %476 = vrot.lane.b32.xlu0 %v471, 126
        %v477 = vpop.permute.xlu0 %476
        %vm480 = vcmask 7168
        %481 = vst.msk [vmem:[%s349] sm:$0xff] %vm480, %v475
        %482 = vst.msk [vmem:[%s349 + $0x8] sm:$0xff] %vm480, %v477
        %v483 = vld [vmem:[#allocation9] sm:$0x1]
        %vm484 = vcmask 23568
        %v485 = vsel %vm484, %v470, -inf
        %v486 = vsel %vm484, %v471, -inf
        %v487 = vmax.f32 %v485, %v486
        %v488 = vrot.slane %v487, 4
        %v489 = vmax.f32 %v487, %v488
        %v490 = vrot.slane %v489, 2
        %v491 = vmax.f32 %v489, %v490
        %v492 = vrot.slane %v491, 1
        %v493 = vmax.f32 %v491, %v492
        %v496 = vunpack.c.l.s4 1966171168
        %v497 = vunpack.c.0.s8 %v496
        %v498 = vlaneseq
        %v499 = vshrl.u32 %v498, 7
        %v500 = vsub.s32 %v497, %v499
        %v501 = vrot.slane %v493, %v500
        %v503 = vunpack.c.l.s4 1966171168
        %v504 = vunpack.c.0.s8 %v503
        %v505 = vlaneseq
        %v506 = vshrl.u32 %v505, 7
        %v507 = vsub.s32 %v504, %v506
        %v508 = vrot.slane %v501, %v507
        %509 = vrot.lane.b32.xlu0 %v508, 126
        %v510 = vpop.permute.xlu0 %509
        %v512 = vmax.f32 %v483, %v510
        %v513 = vld [vmem:[#allocation10] sm:$0x1]
        %v514 = vsub.f32 %v483, %v512
        %v515 = vmul.f32 %v514, 1.442695
        %v516 = vpow.pop %v515
        %v517 = vmul.f32 %v513, %v516
        %v519 = vlaneseq
        %v520 = vshrl.u32 %v519, 7
        %v521 = vsub.s32 0, %v520
        %v522 = vrot.slane %v512, %v521
        %523 = vrot.lane.b32.xlu0 %v522, 2
        %v524 = vpop.permute.xlu0 %523
        %v526 = vsub.f32 %v470, %v524
        %v527 = vsub.f32 %v471, %v524
        %v528 = vmul.f32 %v526, 1.442695
        %v529 = vpow.pop %v528
        %v530 = vmul.f32 %v527, 1.442695
        %v531 = vpow.pop %v530
        %v532 = vsel %vm484, %v529, 0.0
        %v533 = vsel %vm484, %v531, 0.0
        %v534 = vadd.f32 %v532, %v533
        %v535 = vrot.slane %v534, 4
        %v536 = vadd.f32 %v534, %v535
        %v537 = vrot.slane %v536, 2
        %v538 = vadd.f32 %v536, %v537
        %v539 = vrot.slane %v538, 1
        %v540 = vadd.f32 %v538, %v539
        %v543 = vunpack.c.l.s4 1966171168
        %v544 = vunpack.c.0.s8 %v543
        %v545 = vlaneseq
        %v546 = vshrl.u32 %v545, 7
        %v547 = vsub.s32 %v544, %v546
        %v548 = vrot.slane %v540, %v547
        %v550 = vunpack.c.l.s4 1966171168
        %v551 = vunpack.c.0.s8 %v550
        %v552 = vlaneseq
        %v553 = vshrl.u32 %v552, 7
        %v554 = vsub.s32 %v551, %v553
        %v555 = vrot.slane %v548, %v554
        %556 = vrot.lane.b32.xlu0 %v555, 126
        %v557 = vpop.permute.xlu0 %556
        %v559 = vadd.f32 %v517, %v557
        %vm560 = vcmask 0
        %561 = vst.msk [vmem:[#allocation10] sm:$0x1] %vm560, %v559
        %562 = vst.msk [vmem:[#allocation9] sm:$0x1] %vm560, %v512
        %p563 = scmp.eq.s32.totalorder %s26, 2
        // Predicated region
        $region57: #{tpu_custom_call.1} parent=39 // pred_check
          %p564 = pneg %p563
        $region58: #{tpu_custom_call.1} parent=39 // pred_check_branch
          %566 = sbr.rel (%p564) target = $region60
        $region59: #{tpu_custom_call.1} parent=39 // pred_region
          %v567 = vld [vmem:[#allocation2] sm:$0x1]
          %v568 = vmul.f32 %v567, 0.025
          %v569 = vmax.f32 %v568, 0.0
          %v570 = vld [vmem:[#allocation8] sm:$0xff]
          %v571 = vld [vmem:[#allocation8 + $0x8] sm:$0xff]
          %v572 = vld [vmem:[#allocation8 + $0x10] sm:$0xff]
          %v573 = vld [vmem:[#allocation8 + $0x18] sm:$0xff]
          %v574 = vld [vmem:[#allocation8 + $0x20] sm:$0xff]
          %v575 = vld [vmem:[#allocation8 + $0x28] sm:$0xff]
          %v576 = vld [vmem:[#allocation8 + $0x30] sm:$0xff]
          %v577 = vld [vmem:[#allocation8 + $0x38] sm:$0xff]
          %v578 = vld [vmem:[#allocation8 + $0x40] sm:$0xff]
          %v579 = vld [vmem:[#allocation8 + $0x48] sm:$0xff]
          %v580 = vld [vmem:[#allocation8 + $0x50] sm:$0xff]
          %v581 = vld [vmem:[#allocation8 + $0x58] sm:$0xff]
          %v582 = vld [vmem:[#allocation8 + $0x60] sm:$0xff]
          %v583 = vld [vmem:[#allocation8 + $0x68] sm:$0xff]
          %v584 = vld [vmem:[#allocation8 + $0x70] sm:$0xff]
          %v585 = vld [vmem:[#allocation8 + $0x78] sm:$0xff]
          %v586 = vld [vmem:[#allocation8 + $0x80] sm:$0xff]
          %v587 = vld [vmem:[#allocation8 + $0x88] sm:$0xff]
          %v588 = vld [vmem:[#allocation8 + $0x90] sm:$0xff]
          %v589 = vld [vmem:[#allocation8 + $0x98] sm:$0xff]
          %v590 = vld [vmem:[#allocation8 + $0xa0] sm:$0xff]
          %v591 = vld [vmem:[#allocation8 + $0xa8] sm:$0xff]
          %v592 = vld [vmem:[#allocation8 + $0xb0] sm:$0xff]
          %v593 = vld [vmem:[#allocation8 + $0xb8] sm:$0xff]
          %v594 = vld [vmem:[#allocation8 + $0xc0] sm:$0xff]
          %v595 = vld [vmem:[#allocation8 + $0xc8] sm:$0xff]
          %v596 = vld [vmem:[#allocation8 + $0xd0] sm:$0xff]
          %v597 = vld [vmem:[#allocation8 + $0xd8] sm:$0xff]
          %v598 = vld [vmem:[#allocation8 + $0xe0] sm:$0xff]
          %v599 = vld [vmem:[#allocation8 + $0xe8] sm:$0xff]
          %v600 = vld [vmem:[#allocation8 + $0xf0] sm:$0xff]
          %v601 = vld [vmem:[#allocation8 + $0xf8] sm:$0xff]
          %v602 = vld [vmem:[#allocation8 + $0x100] sm:$0xff]
          %v603 = vld [vmem:[#allocation8 + $0x108] sm:$0xff]
          %v604 = vld [vmem:[#allocation8 + $0x110] sm:$0xff]
          %v605 = vld [vmem:[#allocation8 + $0x118] sm:$0xff]
          %v606 = vld [vmem:[#allocation8 + $0x120] sm:$0xff]
          %v607 = vld [vmem:[#allocation8 + $0x128] sm:$0xff]
          %v608 = vld [vmem:[#allocation8 + $0x130] sm:$0xff]
          %v609 = vld [vmem:[#allocation8 + $0x138] sm:$0xff]
          %v610 = vld [vmem:[#allocation8 + $0x140] sm:$0xff]
          %v611 = vld [vmem:[#allocation8 + $0x148] sm:$0xff]
          %v612 = vld [vmem:[#allocation8 + $0x150] sm:$0xff]
          %v613 = vld [vmem:[#allocation8 + $0x158] sm:$0xff]
          %v614 = vld [vmem:[#allocation8 + $0x160] sm:$0xff]
          %v615 = vld [vmem:[#allocation8 + $0x168] sm:$0xff]
          %v616 = vld [vmem:[#allocation8 + $0x170] sm:$0xff]
          %v617 = vld [vmem:[#allocation8 + $0x178] sm:$0xff]
          %v618 = vld [vmem:[#allocation8 + $0x180] sm:$0xff]
          %v619 = vld [vmem:[#allocation8 + $0x188] sm:$0xff]
          %v620 = vld [vmem:[#allocation8 + $0x190] sm:$0xff]
          %v621 = vld [vmem:[#allocation8 + $0x198] sm:$0xff]
          %v622 = vld [vmem:[#allocation8 + $0x1a0] sm:$0xff]
          %v623 = vld [vmem:[#allocation8 + $0x1a8] sm:$0xff]
          %v624 = vld [vmem:[#allocation8 + $0x1b0] sm:$0xff]
          %v625 = vld [vmem:[#allocation8 + $0x1b8] sm:$0xff]
          %v626 = vld [vmem:[#allocation8 + $0x1c0] sm:$0xff]
          %v627 = vld [vmem:[#allocation8 + $0x1c8] sm:$0xff]
          %v628 = vld [vmem:[#allocation8 + $0x1d0] sm:$0xff]
          %v629 = vld [vmem:[#allocation8 + $0x1d8] sm:$0xff]
          %v630 = vld [vmem:[#allocation8 + $0x1e0] sm:$0xff]
          %v631 = vld [vmem:[#allocation8 + $0x1e8] sm:$0xff]
          %v632 = vld [vmem:[#allocation8 + $0x1f0] sm:$0xff]
          %v633 = vld [vmem:[#allocation8 + $0x1f8] sm:$0xff]
          %v634 = vld [vmem:[%s4] sm:$0xf]
          %v636 = vlaneseq
          %v637 = vshrl.u32 %v636, 7
          %v638 = vsub.s32 0, %v637
          %v639 = vrot.slane %v634, %v638
          %v640 = vlaneseq
          %v641 = vshrl.u32 %v640, 7
          %v642 = vsub.s32 1, %v641
          %v643 = vrot.slane %v634, %v642
          %v644 = vlaneseq
          %v645 = vshrl.u32 %v644, 7
          %v646 = vsub.s32 2, %v645
          %v647 = vrot.slane %v634, %v646
          %v648 = vlaneseq
          %v649 = vshrl.u32 %v648, 7
          %v650 = vsub.s32 3, %v649
          %v651 = vrot.slane %v634, %v650
          %656 = vmatprep.subr.mxu0 %v631
          %657 = vmatpush1.msra.mxu0 %v630
          %658 = vmatprep.subr.mxu0 %v627
          %659 = vmatpush1.msra.mxu0 %v626
          %660 = vmatprep.subr.mxu0 %v623
          %661 = vmatpush1.msra.mxu0 %v622
          %662 = vmatprep.subr.mxu0 %v619
          %663 = vmatpush1.msra.mxu0 %v618
          %664 = vmatprep.subr.mxu0 %v615
          %665 = vmatpush1.msra.mxu0 %v614
          %666 = vmatprep.subr.mxu0 %v611
          %667 = vmatpush1.msra.mxu0 %v610
          %668 = vmatprep.subr.mxu0 %v607
          %669 = vmatpush1.msra.mxu0 %v606
          %670 = vmatprep.subr.mxu0 %v603
          %671 = vmatpush1.msra.mxu0 %v602
          %672 = vmatprep.subr.mxu0 %v599
          %673 = vmatpush1.msra.mxu0 %v598
          %674 = vmatprep.subr.mxu0 %v595
          %675 = vmatpush1.msra.mxu0 %v594
          %676 = vmatprep.subr.mxu0 %v591
          %677 = vmatpush1.msra.mxu0 %v590
          %678 = vmatprep.subr.mxu0 %v587
          %679 = vmatpush1.msra.mxu0 %v586
          %680 = vmatprep.subr.mxu0 %v583
          %681 = vmatpush1.msra.mxu0 %v582
          %682 = vmatprep.subr.mxu0 %v579
          %683 = vmatpush1.msra.mxu0 %v578
          %684 = vmatprep.subr.mxu0 %v575
          %685 = vmatpush1.msra.mxu0 %v574
          %686 = vmatprep.subr.mxu0 %v571
          %687 = vmatpush1.msra.mxu0 %v570
          %688 = vmatprep.subr.mxu0 0.0
          %689 = vmatpush2.msra.mxu0 0.0
          %690 = vmatprep.subr.mxu0 0.0
          %691 = vmatpush2.msra.mxu0 0.0
          %692 = vmatprep.subr.mxu0 0.0
          %693 = vmatpush2.msra.mxu0 0.0
          %694 = vmatprep.subr.mxu0 0.0
          %695 = vmatpush2.msra.mxu0 0.0
          %696 = vmatprep.subr.mxu0 0.0
          %697 = vmatpush2.msra.mxu0 0.0
          %698 = vmatprep.subr.mxu0 0.0
          %699 = vmatpush2.msra.mxu0 0.0
          %700 = vmatprep.subr.mxu0 0.0
          %701 = vmatpush2.msra.mxu0 0.0
          %702 = vmatprep.subr.mxu0 0.0
          %703 = vmatpush2.msra.mxu0 0.0
          %704 = vmatprep.subr.mxu0 0.0
          %705 = vmatpush2.msra.mxu0 0.0
          %706 = vmatprep.subr.mxu0 0.0
          %707 = vmatpush2.msra.mxu0 0.0
          %708 = vmatprep.subr.mxu0 0.0
          %709 = vmatpush2.msra.mxu0 0.0
          %710 = vmatprep.subr.mxu0 0.0
          %711 = vmatpush2.msra.mxu0 0.0
          %712 = vmatprep.subr.mxu0 0.0
          %713 = vmatpush2.msra.mxu0 0.0
          %714 = vmatprep.subr.mxu0 0.0
          %715 = vmatpush2.msra.mxu0 0.0
          %716 = vmatprep.subr.mxu0 0.0
          %717 = vmatpush2.msra.mxu0 0.0
          %718 = vmatprep.subr.mxu0 0.0
          %719 = vmatpush2.msra.mxu0 0.0
          %720 = vmatprep.mubr.f32.mxu0 0.0
          %721 = vmatmul.mubr.f32.gmra.mxu0 %v569
          %v722 = vpop.f32.mrf.mxu0
          %v723 = vadd.f32 %v639, %v722
          %v724 = vpop.f32.mrf.mxu0
          %v725 = vadd.f32 %v643, %v724
          %726 = vdwg.mxu0
          %727 = vmatprep.subr.mxu0 %v633
          %728 = vmatpush1.msra.mxu0 %v632
          %729 = vmatprep.subr.mxu0 %v629
          %730 = vmatpush1.msra.mxu0 %v628
          %731 = vmatprep.subr.mxu0 %v625
          %732 = vmatpush1.msra.mxu0 %v624
          %733 = vmatprep.subr.mxu0 %v621
          %734 = vmatpush1.msra.mxu0 %v620
          %735 = vmatprep.subr.mxu0 %v617
          %736 = vmatpush1.msra.mxu0 %v616
          %737 = vmatprep.subr.mxu0 %v613
          %738 = vmatpush1.msra.mxu0 %v612
          %739 = vmatprep.subr.mxu0 %v609
          %740 = vmatpush1.msra.mxu0 %v608
          %741 = vmatprep.subr.mxu0 %v605
          %742 = vmatpush1.msra.mxu0 %v604
          %743 = vmatprep.subr.mxu0 %v601
          %744 = vmatpush1.msra.mxu0 %v600
          %745 = vmatprep.subr.mxu0 %v597
          %746 = vmatpush1.msra.mxu0 %v596
          %747 = vmatprep.subr.mxu0 %v593
          %748 = vmatpush1.msra.mxu0 %v592
          %749 = vmatprep.subr.mxu0 %v589
          %750 = vmatpush1.msra.mxu0 %v588
          %751 = vmatprep.subr.mxu0 %v585
          %752 = vmatpush1.msra.mxu0 %v584
          %753 = vmatprep.subr.mxu0 %v581
          %754 = vmatpush1.msra.mxu0 %v580
          %755 = vmatprep.subr.mxu0 %v577
          %756 = vmatpush1.msra.mxu0 %v576
          %757 = vmatprep.subr.mxu0 %v573
          %758 = vmatpush1.msra.mxu0 %v572
          %759 = vmatprep.subr.mxu0 0.0
          %760 = vmatpush2.msra.mxu0 0.0
          %761 = vmatprep.subr.mxu0 0.0
          %762 = vmatpush2.msra.mxu0 0.0
          %763 = vmatprep.subr.mxu0 0.0
          %764 = vmatpush2.msra.mxu0 0.0
          %765 = vmatprep.subr.mxu0 0.0
          %766 = vmatpush2.msra.mxu0 0.0
          %767 = vmatprep.subr.mxu0 0.0
          %768 = vmatpush2.msra.mxu0 0.0
          %769 = vmatprep.subr.mxu0 0.0
          %770 = vmatpush2.msra.mxu0 0.0
          %771 = vmatprep.subr.mxu0 0.0
          %772 = vmatpush2.msra.mxu0 0.0
          %773 = vmatprep.subr.mxu0 0.0
          %774 = vmatpush2.msra.mxu0 0.0
          %775 = vmatprep.subr.mxu0 0.0
          %776 = vmatpush2.msra.mxu0 0.0
          %777 = vmatprep.subr.mxu0 0.0
          %778 = vmatpush2.msra.mxu0 0.0
          %779 = vmatprep.subr.mxu0 0.0
          %780 = vmatpush2.msra.mxu0 0.0
          %781 = vmatprep.subr.mxu0 0.0
          %782 = vmatpush2.msra.mxu0 0.0
          %783 = vmatprep.subr.mxu0 0.0
          %784 = vmatpush2.msra.mxu0 0.0
          %785 = vmatprep.subr.mxu0 0.0
          %786 = vmatpush2.msra.mxu0 0.0
          %787 = vmatprep.subr.mxu0 0.0
          %788 = vmatpush2.msra.mxu0 0.0
          %789 = vmatprep.subr.mxu0 0.0
          %790 = vmatpush2.msra.mxu0 0.0
          %791 = vmatprep.mubr.f32.mxu0 0.0
          %792 = vmatmul.mubr.f32.gmra.mxu0 %v569
          %v793 = vpop.f32.mrf.mxu0
          %v794 = vadd.f32 %v647, %v793
          %v795 = vpop.f32.mrf.mxu0
          %v796 = vadd.f32 %v651, %v795
          %797 = vdwg.mxu0
          %v798 = vmul.f32 %v723, 0.5
          %v799 = vmul.f32 %v725, 0.5
          %v800 = vmul.f32 %v794, 0.5
          %v801 = vmul.f32 %v796, 0.5
          %v802 = vtanh.pop %v798
          %v803 = vtanh.pop %v799
          %v804 = vtanh.pop %v800
          %v805 = vtanh.pop %v801
          %v810 = vcombine.low %v802, %v803
          %v811 = vcombine.low %v804, %v805
          %v813 = vunpack.c.l.s4 1966171168
          %v814 = vunpack.c.0.s8 %v813
          %v815 = vlaneseq
          %v816 = vshrl.u32 %v815, 7
          %v817 = vsub.s32 %v814, %v816
          %v818 = vrot.slane %v810, %v817
          %v820 = vunpack.c.l.s4 1966171168
          %v821 = vunpack.c.0.s8 %v820
          %v822 = vlaneseq
          %v823 = vshrl.u32 %v822, 7
          %v824 = vsub.s32 %v821, %v823
          %v825 = vrot.slane %v811, %v824
          %v826 = vcombine.low %v818, %v825
          %v828 = vunpack.c.l.s4 1966171168
          %v829 = vunpack.c.0.s8 %v828
          %v830 = vlaneseq
          %v831 = vshrl.u32 %v830, 7
          %v832 = vsub.s32 %v829, %v831
          %v833 = vrot.slane %v826, %v832
          %v835 = vlaneseq
          %vm836 = vcmp.ge.s32.totalorder %v835, 0
          %vm837 = vcmp.lt.s32.totalorder %v835, 512
          %vm838 = vmand %vm836, %vm837
          %839 = vst.msk [vmem:[#allocation12] sm:$0xf] %vm838, %v833
        $region60: #{tpu_custom_call.1} parent=39 // pred_fallthru
          _
        %s840 = smul.u32 2, %s26
        %p841 = scmp.lt.s32.totalorder %s840, 5
        %s842 = scalar_select %p841, %s840, 5
        %s843 = smul.addr %s842, 8
        %s844 = scalar_lea.vmem %s5, %s843
        // Predicated region
        $region61: #{tpu_custom_call.1} parent=39 // pred_check
          %p845 = pneg %p154
        $region62: #{tpu_custom_call.1} parent=39 // pred_check_branch
          %847 = sbr.rel (%p845) target = $region64
        $region63: #{tpu_custom_call.1} parent=39 // pred_region
          %s848 = smul.u32 2, %s26
        $region64: #{tpu_custom_call.1} parent=39 // pred_fallthru
          _
        // Predicated region
        $region65: #{tpu_custom_call.1} parent=39 // pred_check
          %p849 = pneg %p175
        $region66: #{tpu_custom_call.1} parent=39 // pred_check_branch
          %851 = sbr.rel (%p849) target = $region68
        $region67: #{tpu_custom_call.1} parent=39 // pred_region
          %s853 = ssub.s32 16, 16
          %854 = vsyncadd [#allocation5], %s853
          %s856 = sshll.u32 [#allocation9], 4
          %s857 = int_to_ptr.vmem [resolvable:$true] %s856
          %859 = dma.vmem_to_hbm [thread:$0]  %s857, 16, %s6, [#allocation5]
        $region68: #{tpu_custom_call.1} parent=39 // pred_fallthru
          _
        // Predicated region
        $region69: #{tpu_custom_call.1} parent=39 // pred_check
          %p860 = pneg %p196
        $region70: #{tpu_custom_call.1} parent=39 // pred_check_branch
          %862 = sbr.rel (%p860) target = $region72
        $region71: #{tpu_custom_call.1} parent=39 // pred_region
          %s864 = ssub.s32 16, 16
          %865 = vsyncadd [#allocation11], %s864
          %s867 = sshll.u32 [#allocation10], 4
          %s868 = int_to_ptr.vmem [resolvable:$true] %s867
          %870 = dma.vmem_to_hbm [thread:$0]  %s868, 16, %s7, [#allocation11]
        $region72: #{tpu_custom_call.1} parent=39 // pred_fallthru
          _
        // Predicated region
        $region73: #{tpu_custom_call.1} parent=39 // pred_check
          %p871 = pneg %p217
        $region74: #{tpu_custom_call.1} parent=39 // pred_check_branch
          %873 = sbr.rel (%p871) target = $region76
        $region75: #{tpu_custom_call.1} parent=39 // pred_region
          %s875 = ssub.s32 64, 64
          %876 = vsyncadd [#allocation11], %s875
          %s878 = sshll.u32 [#allocation12], 4
          %s879 = int_to_ptr.vmem [resolvable:$true] %s878
          %881 = dma.vmem_to_hbm [thread:$0]  %s879, 64, %s8, [#allocation11]
        $region76: #{tpu_custom_call.1} parent=39 // pred_fallthru
          _
        // Predicated region
        $region77: #{tpu_custom_call.1} parent=39 // pred_check
          %p882 = pneg %p175
        $region78: #{tpu_custom_call.1} parent=39 // pred_check_branch
          %884 = sbr.rel (%p882) target = $region80
        $region79: #{tpu_custom_call.1} parent=39 // pred_region
          %885 = dma.done [#allocation5], 16
        $region80: #{tpu_custom_call.1} parent=39 // pred_fallthru
          _
        // Predicated region
        $region81: #{tpu_custom_call.1} parent=39 // pred_check
          %p886 = pneg %p196
        $region82: #{tpu_custom_call.1} parent=39 // pred_check_branch
          %888 = sbr.rel (%p886) target = $region84
        $region83: #{tpu_custom_call.1} parent=39 // pred_region
          %889 = dma.done [#allocation11], 16
        $region84: #{tpu_custom_call.1} parent=39 // pred_fallthru
          _
        // Predicated region
        $region85: #{tpu_custom_call.1} parent=39 // pred_check
          %p890 = pneg %p217
        $region86: #{tpu_custom_call.1} parent=39 // pred_check_branch
          %892 = sbr.rel (%p890) target = $region88
        $region87: #{tpu_custom_call.1} parent=39 // pred_region
          %893 = dma.done [#allocation11], 64
        $region88: #{tpu_custom_call.1} parent=39 // pred_fallthru
          _
      $region40: #{tpu_custom_call.1} parent=5 // pred_fallthru
        _
      %p894 = scmp.le.s32.totalorder 2, %s21
      // Predicated region
      $region89: #{tpu_custom_call.1} parent=5 // pred_check
        %p895 = pneg %p894
      $region90: #{tpu_custom_call.1} parent=5 // pred_check_branch
        %897 = sbr.rel (%p895) target = $region92
      $region91: #{tpu_custom_call.1} parent=5 // pred_region
        %s898 = ssub.s32 %s21, 2
        // Predicated region
        $region93: #{tpu_custom_call.1} parent=91 // pred_check
          %p899 = pneg %p160
        $region94: #{tpu_custom_call.1} parent=91 // pred_check_branch
          %901 = sbr.rel (%p899) target = $region96
        $region95: #{tpu_custom_call.1} parent=91 // pred_region
          %s902 = smul.u32 2, %s27
          %p903 = scmp.lt.s32.totalorder %s902, 5
          %s904 = scalar_select %p903, %s902, 5
          %s905 = smul.addr %s904, 8
          %s906 = scalar_lea.vmem %s5, %s905
        $region96: #{tpu_custom_call.1} parent=91 // pred_fallthru
          _
      $region92: #{tpu_custom_call.1} parent=5 // pred_fallthru
        _
    $region6: #{tpu_custom_call.1} parent=1 // loop_footer
      %s25 = sadd.s32 1, %s21
    $region7: #{tpu_custom_call.1} parent=1 // loop_footer_branch
      %20 = sbr.rel target = $region3
    $region8: #{tpu_custom_call.1} parent=1 // loop_exit
      _
    %907 = vsyncpa [#allocation4], 1
    %s908 = scalar_lea.sflag [#allocation4], 1
    %909 = vsyncpa %s908, 1
    %910 = vsyncpa [#allocation7], 1
    %s911 = scalar_lea.sflag [#allocation7], 1
    %912 = vsyncpa %s911, 1
    %913 = vsyncpa [#allocation5], 1
    %s914 = scalar_lea.sflag [#allocation5], 1
    %915 = vsyncpa %s914, 1
    %916 = vsyncpa [#allocation11], 1

// kernel: tpu_custom_call.1
$region0: #{tpu_custom_call.1}
  #allocation0 [shape = 'u32[]', space=smem, size = 0x4, offset = 0x4, fixed_abs, tag = 'smem constant byte address 0x4 - core index']
  #allocation1 [shape = 'u32[144,128]{1,0:T(1,128)}', space=vmem, size = 0x12000, scoped, tag = 'internal scratch']
  #allocation2 [shape = 'f32[1,128]{1,0:T(1,128)}', space=vmem, size = 0x200, scoped, tag = 'scratch operand']
  %s0 = inlined_call_operand.hbm [shape: bf16[48,128], index: 0, kind: input, shape index: {}]
  %s1 = inlined_call_operand.hbm [shape: bf16[48,48], index: 1, kind: input, shape index: {}]
  %s2 = inlined_call_operand.vmem [shape: f32[1,128], index: 2, kind: input, shape index: {}]
  %s3 = inlined_call_operand.hbm [shape: f32[128,512], index: 3, kind: input, shape index: {}]
  %s4 = inlined_call_operand.vmem [shape: f32[1,512], index: 4, kind: input, shape index: {}]
  %s5 = inlined_call_operand.vmem [shape: f32[48,1], index: 5, kind: output, shape index: {0}]
  %s6 = inlined_call_operand.hbm [shape: f32[1,1], index: 6, kind: output, shape index: {1}]
  %s7 = inlined_call_operand.hbm [shape: f32[1,1], index: 7, kind: output, shape index: {2}]
  %s8 = inlined_call_operand.hbm [shape: f32[1,512], index: 8, kind: output, shape index: {3}]
  %9 = xla_tuple %s5, %s6, %s7, %s8
  %s10 = sld [smem:[#allocation0]]
  $region97: #{tpu_custom_call.1} parent=0
    _
  %s12 = ssub.s32 1, %s10
  %s13 = scalar_select 0, %s12, %s10
  $region1: #{tpu_custom_call.1} parent=0
    #allocation3 [shape = 'u8[12288]{0}', space=vmem, size = 0x3000, scoped, tag = 'input window, operand 0, single buffered']
    #allocation4 [shape = 's32[2]{0}', space=sflag, size = 0x8, scoped, tag = 'scoped memory for tpu_custom_call.1']
    #allocation5 [shape = 's32[2]{0}', space=sflag, size = 0x8, scoped, tag = 'scoped memory for tpu_custom_call.1']
    #allocation6 [shape = 'u8[8192]{0}', space=vmem, size = 0x2000, scoped, tag = 'input window, operand 1']
    #allocation7 [shape = 's32[2]{0}', space=sflag, size = 0x8, scoped, tag = 'scoped memory for tpu_custom_call.1']
    #allocation8 [shape = 'u8[262144]{0}', space=vmem, size = 0x40000, scoped, tag = 'input window, operand 3, single buffered']
    #allocation9 [shape = 'u8[512]{0}', space=vmem, size = 0x400, scoped, tag = 'output window, operand 1, single buffered']
    #allocation10 [shape = 'u8[512]{0}', space=vmem, size = 0x400, scoped, tag = 'output window, operand 2, single buffered']
    #allocation11 [shape = 's32[1]{0}', space=sflag, size = 0x4, scoped, tag = 'scoped memory for tpu_custom_call.1']
    #allocation12 [shape = 'u8[2048]{0}', space=vmem, size = 0x800, scoped, tag = 'output window, operand 3, single buffered']
    %14 = vsyncpa [#allocation4], 0
    %15 = vsyncpa [#allocation7], 0
    %s16 = scalar_lea.sflag [#allocation7], 1
    %17 = vsyncpa %s16, 0
    %18 = vsyncpa [#allocation5], 0
    %19 = vsyncpa [#allocation11], 0
    loop: start=0, step=1, limit=5
    $region2: #{tpu_custom_call.1} parent=1 // loop_pre_header
      _
    $region3: #{tpu_custom_call.1} parent=1 // loop_header
      %s21 = sphi 0, %s25
      %p22 = scmp.ge.s32.totalorder %s21, 5
      %s29 = sphi 0, %s29
      %s31 = sphi 0, %s29
      %s32 = sphi 0, %s31
      %s46 = sphi 0, %s32
      %s52 = sphi 0, %s54
      %s55 = sphi 0, %s52
      %s56 = sphi 0, %s55
      %s72 = sphi 0, %s56
      %s76 = sphi 0, %s76
      %s78 = sphi 0, %s76
      %s79 = sphi 0, %s78
      %s93 = sphi 0, %s79
      %s97 = sphi 0, %s97
      %s99 = sphi 0, %s97
      %s100 = sphi 0, %s99
      %s114 = sphi 0, %s100
      %s118 = sphi 0, %s118
      %s120 = sphi 0, %s118
      %s121 = sphi 0, %s120
      %s135 = sphi 0, %s121
      %s141 = sphi 0, %s143
      %s144 = sphi 0, %s141
      %s145 = sphi 0, %s144
      %s161 = sphi 0, %s145
      %s165 = sphi 0, %s165
      %s167 = sphi 0, %s165
      %s168 = sphi 0, %s167
      %s182 = sphi 0, %s168
      %s186 = sphi 0, %s186
      %s188 = sphi 0, %s186
      %s189 = sphi 0, %s188
      %s203 = sphi 0, %s189
      %s207 = sphi 0, %s207
      %s209 = sphi 0, %s207
      %s210 = sphi 0, %s209
      %s224 = sphi 0, %s210
    $region4: #{tpu_custom_call.1} parent=1 // loop_header_branch
      %24 = sbr.rel (%p22) target = $region8
    $region5: #{tpu_custom_call.1} parent=1 // loop_body
      %s26 = ssub.s32 %s21, 1
      %s27 = ssub.s32 %s21, 2
      %s28 = sadd.s32 %s21, 1
      %s30 = sadd.s32 %s29, 1
      %p33 = scmp.eq.s32.totalorder %s21, 2
      %p34 = scmp.ne.s32.totalorder %s29, %s31
      %p35 = scmp.eq.s32.totalorder %s21, 0
      %p36 = por %p34, %p35
      %p37 = scmp.ne.s32.totalorder %s29, %s31
      %p38 = scmp.eq.s32.totalorder %s26, 2
      %p39 = por %p37, %p38
      %p40 = scmp.ne.s32.totalorder %s31, %s32
      %p41 = scmp.eq.s32.totalorder %s26, 0
      %p42 = por %p40, %p41
      %p43 = scmp.ne.s32.totalorder %s31, %s32
      %p44 = scmp.eq.s32.totalorder %s27, 2
      %p45 = por %p43, %p44
      %p47 = scmp.ne.s32.totalorder %s32, %s46
      %p48 = scmp.eq.s32.totalorder %s27, 0
      %p49 = por %p47, %p48
      %s50 = ssub.s32 %s21, %s28
      %p51 = scmp.eq.s32.totalorder %s50, 0
      %s53 = sadd.s32 %s52, 1
      %s54 = scalar_select %p51, %s52, %s53
      %p57 = pneg %p51
      %p58 = scmp.eq.s32.totalorder %s21, 2
      %p59 = por %p57, %p58
      %p60 = scmp.ne.s32.totalorder %s52, %s55
      %p61 = scmp.eq.s32.totalorder %s21, 0
      %p62 = por %p60, %p61
      %p63 = scmp.ne.s32.totalorder %s52, %s55
      %p64 = scmp.eq.s32.totalorder %s26, 2
      %p65 = por %p63, %p64
      %p66 = scmp.ne.s32.totalorder %s55, %s56
      %p67 = scmp.eq.s32.totalorder %s26, 0
      %p68 = por %p66, %p67
      %p69 = scmp.ne.s32.totalorder %s55, %s56
      %p70 = scmp.eq.s32.totalorder %s27, 2
      %p71 = por %p69, %p70
      %p73 = scmp.ne.s32.totalorder %s56, %s72
      %p74 = scmp.eq.s32.totalorder %s27, 0
      %p75 = por %p73, %p74
      %s77 = sadd.s32 %s76, 1
      %p80 = scmp.eq.s32.totalorder %s21, 2
      %p81 = scmp.ne.s32.totalorder %s76, %s78
      %p82 = scmp.eq.s32.totalorder %s21, 0
      %p83 = por %p81, %p82
      %p84 = scmp.ne.s32.totalorder %s76, %s78
      %p85 = scmp.eq.s32.totalorder %s26, 2
      %p86 = por %p84, %p85
      %p87 = scmp.ne.s32.totalorder %s78, %s79
      %p88 = scmp.eq.s32.totalorder %s26, 0
      %p89 = por %p87, %p88
      %p90 = scmp.ne.s32.totalorder %s78, %s79
      %p91 = scmp.eq.s32.totalorder %s27, 2
      %p92 = por %p90, %p91
      %p94 = scmp.ne.s32.totalorder %s79, %s93
      %p95 = scmp.eq.s32.totalorder %s27, 0
      %p96 = por %p94, %p95
      %s98 = sadd.s32 %s97, 1
      %p101 = scmp.eq.s32.totalorder %s21, 2
      %p102 = scmp.ne.s32.totalorder %s97, %s99
      %p103 = scmp.eq.s32.totalorder %s21, 0
      %p104 = por %p102, %p103
      %p105 = scmp.ne.s32.totalorder %s97, %s99
      %p106 = scmp.eq.s32.totalorder %s26, 2
      %p107 = por %p105, %p106
      %p108 = scmp.ne.s32.totalorder %s99, %s100
      %p109 = scmp.eq.s32.totalorder %s26, 0
      %p110 = por %p108, %p109
      %p111 = scmp.ne.s32.totalorder %s99, %s100
      %p112 = scmp.eq.s32.totalorder %s27, 2
      %p113 = por %p111, %p112
      %p115 = scmp.ne.s32.totalorder %s100, %s114
      %p116 = scmp.eq.s32.totalorder %s27, 0
      %p117 = por %p115, %p116
      %s119 = sadd.s32 %s118, 1
      %p122 = scmp.eq.s32.totalorder %s21, 2
      %p123 = scmp.ne.s32.totalorder %s118, %s120
      %p124 = scmp.eq.s32.totalorder %s21, 0
      %p125 = por %p123, %p124
      %p126 = scmp.ne.s32.totalorder %s118, %s120
      %p127 = scmp.eq.s32.totalorder %s26, 2
      %p128 = por %p126, %p127
      %p129 = scmp.ne.s32.totalorder %s120, %s121
      %p130 = scmp.eq.s32.totalorder %s26, 0
      %p131 = por %p129, %p130
      %p132 = scmp.ne.s32.totalorder %s120, %s121
      %p133 = scmp.eq.s32.totalorder %s27, 2
      %p134 = por %p132, %p133
      %p136 = scmp.ne.s32.totalorder %s121, %s135
      %p137 = scmp.eq.s32.totalorder %s27, 0
      %p138 = por %p136, %p137
      %s139 = ssub.s32 %s21, %s28
      %p140 = scmp.eq.s32.totalorder %s139, 0
      %s142 = sadd.s32 %s141, 1
      %s143 = scalar_select %p140, %s141, %s142
      %p146 = pneg %p140
      %p147 = scmp.eq.s32.totalorder %s21, 2
      %p148 = por %p146, %p147
      %p149 = scmp.ne.s32.totalorder %s141, %s144
      %p150 = scmp.eq.s32.totalorder %s21, 0
      %p151 = por %p149, %p150
      %p152 = scmp.ne.s32.totalorder %s141, %s144
      %p153 = scmp.eq.s32.totalorder %s26, 2
      %p154 = por %p152, %p153
      %p155 = scmp.ne.s32.totalorder %s144, %s145
      %p156 = scmp.eq.s32.totalorder %s26, 0
      %p157 = por %p155, %p156
      %p158 = scmp.ne.s32.totalorder %s144, %s145
      %p159 = scmp.eq.s32.totalorder %s27, 2
      %p160 = por %p158, %p159
      %p162 = scmp.ne.s32.totalorder %s145, %s161
      %p163 = scmp.eq.s32.totalorder %s27, 0
      %p164 = por %p162, %p163
      %s166 = sadd.s32 %s165, 1
      %p169 = scmp.eq.s32.totalorder %s21, 2
      %p170 = scmp.ne.s32.totalorder %s165, %s167
      %p171 = scmp.eq.s32.totalorder %s21, 0
      %p172 = por %p170, %p171
      %p173 = scmp.ne.s32.totalorder %s165, %s167
      %p174 = scmp.eq.s32.totalorder %s26, 2
      %p175 = por %p173, %p174
      %p176 = scmp.ne.s32.totalorder %s167, %s168
      %p177 = scmp.eq.s32.totalorder %s26, 0
      %p178 = por %p176, %p177
      %p179 = scmp.ne.s32.totalorder %s167, %s168
      %p180 = scmp.eq.s32.totalorder %s27, 2
      %p181 = por %p179, %p180
      %p183 = scmp.ne.s32.totalorder %s168, %s182
      %p184 = scmp.eq.s32.totalorder %s27, 0
      %p185 = por %p183, %p184
      %s187 = sadd.s32 %s186, 1
      %p190 = scmp.eq.s32.totalorder %s21, 2
      %p191 = scmp.ne.s32.totalorder %s186, %s188
      %p192 = scmp.eq.s32.totalorder %s21, 0
      %p193 = por %p191, %p192
      %p194 = scmp.ne.s32.totalorder %s186, %s188
      %p195 = scmp.eq.s32.totalorder %s26, 2
      %p196 = por %p194, %p195
      %p197 = scmp.ne.s32.totalorder %s188, %s189
      %p198 = scmp.eq.s32.totalorder %s26, 0
      %p199 = por %p197, %p198
      %p200 = scmp.ne.s32.totalorder %s188, %s189
      %p201 = scmp.eq.s32.totalorder %s27, 2
      %p202 = por %p200, %p201
      %p204 = scmp.ne.s32.totalorder %s189, %s203
      %p205 = scmp.eq.s32.totalorder %s27, 0
      %p206 = por %p204, %p205
      %s208 = sadd.s32 %s207, 1
      %p211 = scmp.eq.s32.totalorder %s21, 2
      %p212 = scmp.ne.s32.totalorder %s207, %s209
      %p213 = scmp.eq.s32.totalorder %s21, 0
      %p214 = por %p212, %p213
      %p215 = scmp.ne.s32.totalorder %s207, %s209
      %p216 = scmp.eq.s32.totalorder %s26, 2
      %p217 = por %p215, %p216
      %p218 = scmp.ne.s32.totalorder %s209, %s210
      %p219 = scmp.eq.s32.totalorder %s26, 0
      %p220 = por %p218, %p219
      %p221 = scmp.ne.s32.totalorder %s209, %s210
      %p222 = scmp.eq.s32.totalorder %s27, 2
      %p223 = por %p221, %p222
      %p225 = scmp.ne.s32.totalorder %s210, %s224
      %p226 = scmp.eq.s32.totalorder %s27, 0
      %p227 = por %p225, %p226
      %p228 = scmp.le.s32.totalorder 1, %s21
      %p229 = scmp.lt.s32.totalorder %s21, 4
      %p230 = pnand %p228, %p229
      %p231 = pneg %p230
      // Predicated region
      $region9: #{tpu_custom_call.1} parent=5 // pred_check
        _
      $region10: #{tpu_custom_call.1} parent=5 // pred_check_branch
        %233 = sbr.rel (%p230) target = $region12
      $region11: #{tpu_custom_call.1} parent=5 // pred_region
        %s234 = ssub.s32 %s21, 1
        // Predicated region
        $region13: #{tpu_custom_call.1} parent=11 // pred_check
          %p235 = pneg %p42
        $region14: #{tpu_custom_call.1} parent=11 // pred_check_branch
          %237 = sbr.rel (%p235) target = $region16
        $region15: #{tpu_custom_call.1} parent=11 // pred_region
          %s239 = ssub.s32 384, 384
          %240 = vsyncadd [#allocation4], %s239
          %s241 = sshll.u32 [#allocation3], 4
          %s242 = int_to_ptr.vmem [resolvable:$true] %s241
          %247 = dma.hbm_to_vmem [thread:$0]  %s0, 384, %s242, [#allocation4], 64, 64, 4
        $region16: #{tpu_custom_call.1} parent=11 // pred_fallthru
          _
        // Predicated region
        $region17: #{tpu_custom_call.1} parent=11 // pred_check
          %p248 = pneg %p89
        $region18: #{tpu_custom_call.1} parent=11 // pred_check_branch
          %250 = sbr.rel (%p248) target = $region20
        $region19: #{tpu_custom_call.1} parent=11 // pred_region
          _
        $region20: #{tpu_custom_call.1} parent=11 // pred_fallthru
          _
        // Predicated region
        $region21: #{tpu_custom_call.1} parent=11 // pred_check
          %p251 = pneg %p110
        $region22: #{tpu_custom_call.1} parent=11 // pred_check_branch
          %253 = sbr.rel (%p251) target = $region24
        $region23: #{tpu_custom_call.1} parent=11 // pred_region
          %s255 = ssub.s32 8192, 8192
          %256 = vsyncadd [#allocation7], %s255
          %s257 = sshll.u32 [#allocation8], 4
          %s258 = int_to_ptr.vmem [resolvable:$true] %s257
          %263 = dma.hbm_to_vmem [thread:$0]  %s3, 8192, %s258, [#allocation7], 512, 512, 32
        $region24: #{tpu_custom_call.1} parent=11 // pred_fallthru
          _
        // Predicated region
        $region25: #{tpu_custom_call.1} parent=11 // pred_check
          %p264 = pneg %p131
        $region26: #{tpu_custom_call.1} parent=11 // pred_check_branch
          %266 = sbr.rel (%p264) target = $region28
        $region27: #{tpu_custom_call.1} parent=11 // pred_region
          _
        $region28: #{tpu_custom_call.1} parent=11 // pred_fallthru
          _
      $region12: #{tpu_custom_call.1} parent=5 // pred_fallthru
        _
      %p267 = scmp.lt.s32.totalorder %s21, 3
      // Predicated region
      $region29: #{tpu_custom_call.1} parent=5 // pred_check
        %p268 = pneg %p267
      $region30: #{tpu_custom_call.1} parent=5 // pred_check_branch
        %270 = sbr.rel (%p268) target = $region32
      $region31: #{tpu_custom_call.1} parent=5 // pred_region
        // Predicated region
        $region33: #{tpu_custom_call.1} parent=31 // pred_check
          %p271 = pneg %p62
        $region34: #{tpu_custom_call.1} parent=31 // pred_check_branch
          %273 = sbr.rel (%p271) target = $region36
        $region35: #{tpu_custom_call.1} parent=31 // pred_region
          %s274 = sand.u32 %s21, 1
          %s275 = scalar_lea.sflag [#allocation7], %s274
          %s276 = sand.u32 %s52, 1
          %s277 = smul.addr %s276, 8
          %s278 = scalar_lea.vmem [#allocation6], %s277
          %s279 = smul.u32 2, %s21
          %s281 = ssub.s32 128, 128
          %282 = vsyncadd %s275, %s281
          %s283 = smul.addr %s279, 64
          %s284 = scalar_lea.hbm %s1, %s283
          %s285 = sshll.u32 %s278, 4
          %s286 = int_to_ptr.vmem [resolvable:$true] %s285
          %291 = dma.hbm_to_vmem [thread:$0]  %s284, 128, %s286, %s275, 64, 64, 4
        $region36: #{tpu_custom_call.1} parent=31 // pred_fallthru
          _
      $region32: #{tpu_custom_call.1} parent=5 // pred_fallthru
        _
      %p292 = scmp.le.s32.totalorder 1, %s21
      %p293 = scmp.lt.s32.totalorder %s21, 4
      %p294 = pnand %p292, %p293
      %p295 = pneg %p294
      // Predicated region
      $region37: #{tpu_custom_call.1} parent=5 // pred_check
        _
      $region38: #{tpu_custom_call.1} parent=5 // pred_check_branch
        %297 = sbr.rel (%p294) target = $region40
      $region39: #{tpu_custom_call.1} parent=5 // pred_region
        %s298 = ssub.s32 %s21, 1
        // Predicated region
        $region41: #{tpu_custom_call.1} parent=39 // pred_check
          %p299 = pneg %p42
        $region42: #{tpu_custom_call.1} parent=39 // pred_check_branch
          %301 = sbr.rel (%p299) target = $region44
        $region43: #{tpu_custom_call.1} parent=39 // pred_region
          %302 = dma.done [#allocation4], 384
        $region44: #{tpu_custom_call.1} parent=39 // pred_fallthru
          _
        %s303 = sand.u32 %s26, 1
        %s304 = scalar_lea.sflag [#allocation7], %s303
        %s305 = sand.u32 %s55, 1
        %s306 = smul.addr %s305, 8
        %s307 = scalar_lea.vmem [#allocation6], %s306
        // Predicated region
        $region45: #{tpu_custom_call.1} parent=39 // pred_check
          %p308 = pneg %p68
        $region46: #{tpu_custom_call.1} parent=39 // pred_check_branch
          %310 = sbr.rel (%p308) target = $region48
        $region47: #{tpu_custom_call.1} parent=39 // pred_region
          %311 = dma.done %s304, 128
        $region48: #{tpu_custom_call.1} parent=39 // pred_fallthru
          _
        // Predicated region
        $region49: #{tpu_custom_call.1} parent=39 // pred_check
          %p312 = pneg %p110
        $region50: #{tpu_custom_call.1} parent=39 // pred_check_branch
          %314 = sbr.rel (%p312) target = $region52
        $region51: #{tpu_custom_call.1} parent=39 // pred_region
          %315 = dma.done [#allocation7], 8192
        $region52: #{tpu_custom_call.1} parent=39 // pred_fallthru
          _
        %p316 = pneg %p42
        %p317 = pneg %p39
        %s318 = sand.u32 %s26, 1
        %s319 = scalar_lea.sflag [#allocation7], %s318
        %s320 = sand.u32 %s55, 1
        %s321 = smul.addr %s320, 8
        %s322 = scalar_lea.vmem [#allocation6], %s321
        %p323 = pneg %p68
        %p324 = pneg %p65
        %p325 = pneg %p89
        %p326 = pneg %p86
        %p327 = pneg %p110
        %p328 = pneg %p107
        %p329 = pneg %p131
        %p330 = pneg %p128
        %p331 = pneg %p157
        %p332 = pneg %p154
        %s333 = smul.u32 2, %s26
        %p334 = scmp.lt.s32.totalorder %s333, 5
        %s335 = scalar_select %p334, %s333, 5
        %s336 = smul.addr %s335, 8
        %s337 = scalar_lea.vmem %s5, %s336
        %p338 = pneg %p178
        %p339 = pneg %p175
        %p340 = pneg %p199
        %p341 = pneg %p196
        %p342 = pneg %p220
        %p343 = pneg %p217
        %s344 = smul.u32 2, %s26
        %s345 = smul.u32 2, %s26
        %p346 = scmp.lt.s32.totalorder %s345, 5
        %s347 = scalar_select %p346, %s345, 5
        %s348 = smul.addr %s347, 8
        %s349 = scalar_lea.vmem %s5, %s348
        %s350 = smul.u32 2, %s26
        %p352 = scmp.eq.s32.totalorder %s26, 0
        // Predicated region
        $region53: #{tpu_custom_call.1} parent=39 // pred_check
          %p353 = pneg %p352
        $region54: #{tpu_custom_call.1} parent=39 // pred_check_branch
          %355 = sbr.rel (%p353) target = $region56
        $region55: #{tpu_custom_call.1} parent=39 // pred_region
          %356 = vst [vmem:[#allocation2] sm:$0x1] 0.0
          %vm357 = vcmask 0
          %358 = vst.msk [vmem:[#allocation9] sm:$0x1] %vm357, -1e+30
          %359 = vst.msk [vmem:[#allocation10] sm:$0x1] %vm357, 0.0
        $region56: #{tpu_custom_call.1} parent=39 // pred_fallthru
          _
        %v360 = vld [vmem:[%s307] sm:$0xf]
        %v361 = vld [vmem:[%s307 + $0x4] sm:$0xf]
        %v362 = vld [vmem:[#allocation3] sm:$0xf]
        %v363 = vld [vmem:[#allocation3 + $0x4] sm:$0xf]
        %v364 = vld [vmem:[#allocation3 + $0x8] sm:$0xf]
        %v365 = vld [vmem:[#allocation3 + $0xc] sm:$0xf]
        %v366 = vld [vmem:[#allocation3 + $0x10] sm:$0xf]
        %v367 = vld [vmem:[#allocation3 + $0x14] sm:$0xf]
        %v368 = vld [vmem:[%s2] sm:$0x1]
        %v370 = vlaneseq
        %v371 = vshrl.u32 %v370, 7
        %v372 = vsub.s32 0, %v371
        %v373 = vrot.slane %v368, %v372
        %v377 = vunpack.c.l.b16 %v360
        %v378 = vunpack.c.l.b16 %v361
        %v379 = vpack.c.b16 %v378, %v377
        %v386 = vunpack.c.l.b16 %v362
        %v387 = vunpack.c.l.b16 %v363
        %v388 = vunpack.c.l.b16 %v364
        %v389 = vunpack.c.l.b16 %v365
        %v390 = vunpack.c.l.b16 %v366
        %v391 = vunpack.c.l.b16 %v367
        %v392 = vpack.c.b16 %v387, %v386
        %v393 = vpack.c.b16 %v389, %v388
        %v394 = vpack.c.b16 %v391, %v390
        %vm398 = vcmask 392192
        %v400 = vsel %vm398, %v379, 0
        %402 = vmatprep.subr.bf16.mxu0 0
        %403 = vmatpush1.bf16.msra.mxu0 0
        %404 = vmatprep.subr.bf16.mxu0 0
        %405 = vmatpush1.bf16.msra.mxu0 0
        %406 = vmatprep.subr.bf16.mxu0 0
        %407 = vmatpush1.bf16.msra.mxu0 0
        %408 = vmatprep.subr.bf16.mxu0 0
        %409 = vmatpush1.bf16.msra.mxu0 0
        %410 = vmatprep.subr.bf16.mxu0 0
        %411 = vmatpush1.bf16.msra.mxu0 0
        %412 = vmatprep.subr.bf16.mxu0 0
        %413 = vmatpush1.bf16.msra.mxu0 %v394
        %414 = vmatprep.subr.bf16.mxu0 0
        %415 = vmatpush1.bf16.msra.mxu0 %v393
        %416 = vmatprep.subr.bf16.mxu0 0
        %417 = vmatpush1.bf16.msra.mxu0 %v392
        %418 = vmatprep.subr.bf16.mxu0 0
        %419 = vmatpush2.bf16.msra.mxu0 0
        %420 = vmatprep.subr.bf16.mxu0 0
        %421 = vmatpush2.bf16.msra.mxu0 0
        %422 = vmatprep.subr.bf16.mxu0 0
        %423 = vmatpush2.bf16.msra.mxu0 0
        %424 = vmatprep.subr.bf16.mxu0 0
        %425 = vmatpush2.bf16.msra.mxu0 0
        %426 = vmatprep.subr.bf16.mxu0 0
        %427 = vmatpush2.bf16.msra.mxu0 0
        %428 = vmatprep.subr.bf16.mxu0 0
        %429 = vmatpush2.bf16.msra.mxu0 0
        %430 = vmatprep.subr.bf16.mxu0 0
        %431 = vmatpush2.bf16.msra.mxu0 0
        %432 = vmatprep.subr.bf16.mxu0 0
        %433 = vmatpush2.bf16.msra.mxu0 0
        %434 = vmatprep.mubr.bf16.mxu0 0
        %435 = vmatmul.mubr.bf16.gmra.mxu0 %v400
        %v436 = vpop.f32.mrf.mxu0
        %v437 = vadd.f32 %v373, %v436
        %v438 = vpop.f32.mrf.mxu0
        %v439 = vpop.f32.mrf.mxu0
        %v440 = vadd.f32 %v373, %v439
        %v441 = vpop.f32.mrf.mxu0
        %442 = vdwg.mxu0
        %s443 = smul.u32 %s26, 16
        %v444 = vlaneseq
        %v445 = vshrl.u32 %v444, 7
        %v446 = vadd.s32 %v445, 8
        %v447 = vstv %s443
        %v448 = vadd.s32 %v447, %v445
        %v449 = vadd.s32 %v447, %v446
        %vm450 = vcmp.lt.s32.totalorder %v448, 40
        %vm451 = vcmp.lt.s32.totalorder %v449, 40
        %v452 = vld [vmem:[#allocation2] sm:$0x1]
        %v453 = vsel %vm450, 1, 0
        %v454 = vsel %vm451, 1, 0
        %vm455 = vcmp.eq.s32.totalorder %v453, 1
        %vm456 = vcmp.eq.s32.totalorder %v454, 1
        %v457 = vsel %vm455, %v437, 0.0
        %v458 = vsel %vm456, %v440, 0.0
        %v459 = vadd.f32 %v457, %v458
        %v460 = vrot.slane %v459, 4
        %v461 = vadd.f32 %v459, %v460
        %v462 = vrot.slane %v461, 2
        %v463 = vadd.f32 %v461, %v462
        %v464 = vrot.slane %v463, 1
        %v465 = vadd.f32 %v463, %v464
        %v466 = vadd.f32 %v452, %v465
        %467 = vst [vmem:[#allocation2] sm:$0x1] %v466
        %v468 = vmul.f32 %v437, 0.1
        %v469 = vmul.f32 %v440, 0.1
        %v470 = vsel %vm450, %v468, -1e+30
        %v471 = vsel %vm451, %v469, -1e+30
        %474 = vrot.lane.b32.xlu0 %v470, 126
        %v475 = vpop.permute.xlu0 %474
        %476 = vrot.lane.b32.xlu0 %v471, 126
        %v477 = vpop.permute.xlu0 %476
        %vm480 = vcmask 7168
        %481 = vst.msk [vmem:[%s349] sm:$0xff] %vm480, %v475
        %482 = vst.msk [vmem:[%s349 + $0x8] sm:$0xff] %vm480, %v477
        %v483 = vld [vmem:[#allocation9] sm:$0x1]
        %vm484 = vcmask 23568
        %v485 = vsel %vm484, %v470, -inf
        %v486 = vsel %vm484, %v471, -inf
        %v487 = vmax.f32 %v485, %v486
        %v488 = vrot.slane %v487, 4
        %v489 = vmax.f32 %v487, %v488
        %v490 = vrot.slane %v489, 2
        %v491 = vmax.f32 %v489, %v490
        %v492 = vrot.slane %v491, 1
        %v493 = vmax.f32 %v491, %v492
        %v496 = vunpack.c.l.s4 1966171168
        %v497 = vunpack.c.0.s8 %v496
        %v498 = vlaneseq
        %v499 = vshrl.u32 %v498, 7
        %v500 = vsub.s32 %v497, %v499
        %v501 = vrot.slane %v493, %v500
        %v503 = vunpack.c.l.s4 1966171168
        %v504 = vunpack.c.0.s8 %v503
        %v505 = vlaneseq
        %v506 = vshrl.u32 %v505, 7
        %v507 = vsub.s32 %v504, %v506
        %v508 = vrot.slane %v501, %v507
        %509 = vrot.lane.b32.xlu0 %v508, 126
        %v510 = vpop.permute.xlu0 %509
        %v512 = vmax.f32 %v483, %v510
        %v513 = vld [vmem:[#allocation10] sm:$0x1]
        %v514 = vsub.f32 %v483, %v512
        %v515 = vmul.f32 %v514, 1.442695
        %v516 = vpow.pop %v515
        %v517 = vmul.f32 %v513, %v516
        %v519 = vlaneseq
        %v520 = vshrl.u32 %v519, 7
        %v521 = vsub.s32 0, %v520
        %v522 = vrot.slane %v512, %v521
        %523 = vrot.lane.b32.xlu0 %v522, 2
        %v524 = vpop.permute.xlu0 %523
        %v526 = vsub.f32 %v470, %v524
        %v527 = vsub.f32 %v471, %v524
        %v528 = vmul.f32 %v526, 1.442695
        %v529 = vpow.pop %v528
        %v530 = vmul.f32 %v527, 1.442695
        %v531 = vpow.pop %v530
        %v532 = vsel %vm484, %v529, 0.0
        %v533 = vsel %vm484, %v531, 0.0
        %v534 = vadd.f32 %v532, %v533
        %v535 = vrot.slane %v534, 4
        %v536 = vadd.f32 %v534, %v535
        %v537 = vrot.slane %v536, 2
        %v538 = vadd.f32 %v536, %v537
        %v539 = vrot.slane %v538, 1
        %v540 = vadd.f32 %v538, %v539
        %v543 = vunpack.c.l.s4 1966171168
        %v544 = vunpack.c.0.s8 %v543
        %v545 = vlaneseq
        %v546 = vshrl.u32 %v545, 7
        %v547 = vsub.s32 %v544, %v546
        %v548 = vrot.slane %v540, %v547
        %v550 = vunpack.c.l.s4 1966171168
        %v551 = vunpack.c.0.s8 %v550
        %v552 = vlaneseq
        %v553 = vshrl.u32 %v552, 7
        %v554 = vsub.s32 %v551, %v553
        %v555 = vrot.slane %v548, %v554
        %556 = vrot.lane.b32.xlu0 %v555, 126
        %v557 = vpop.permute.xlu0 %556
        %v559 = vadd.f32 %v517, %v557
        %vm560 = vcmask 0
        %561 = vst.msk [vmem:[#allocation10] sm:$0x1] %vm560, %v559
        %562 = vst.msk [vmem:[#allocation9] sm:$0x1] %vm560, %v512
        %p563 = scmp.eq.s32.totalorder %s26, 2
        // Predicated region
        $region57: #{tpu_custom_call.1} parent=39 // pred_check
          %p564 = pneg %p563
        $region58: #{tpu_custom_call.1} parent=39 // pred_check_branch
          %566 = sbr.rel (%p564) target = $region60
        $region59: #{tpu_custom_call.1} parent=39 // pred_region
          %v567 = vld [vmem:[#allocation2] sm:$0x1]
          %v568 = vmul.f32 %v567, 0.025
          %v569 = vmax.f32 %v568, 0.0
          %v570 = vld [vmem:[#allocation8] sm:$0xff]
          %v571 = vld [vmem:[#allocation8 + $0x8] sm:$0xff]
          %v572 = vld [vmem:[#allocation8 + $0x10] sm:$0xff]
          %v573 = vld [vmem:[#allocation8 + $0x18] sm:$0xff]
          %v574 = vld [vmem:[#allocation8 + $0x20] sm:$0xff]
          %v575 = vld [vmem:[#allocation8 + $0x28] sm:$0xff]
          %v576 = vld [vmem:[#allocation8 + $0x30] sm:$0xff]
          %v577 = vld [vmem:[#allocation8 + $0x38] sm:$0xff]
          %v578 = vld [vmem:[#allocation8 + $0x40] sm:$0xff]
          %v579 = vld [vmem:[#allocation8 + $0x48] sm:$0xff]
          %v580 = vld [vmem:[#allocation8 + $0x50] sm:$0xff]
          %v581 = vld [vmem:[#allocation8 + $0x58] sm:$0xff]
          %v582 = vld [vmem:[#allocation8 + $0x60] sm:$0xff]
          %v583 = vld [vmem:[#allocation8 + $0x68] sm:$0xff]
          %v584 = vld [vmem:[#allocation8 + $0x70] sm:$0xff]
          %v585 = vld [vmem:[#allocation8 + $0x78] sm:$0xff]
          %v586 = vld [vmem:[#allocation8 + $0x80] sm:$0xff]
          %v587 = vld [vmem:[#allocation8 + $0x88] sm:$0xff]
          %v588 = vld [vmem:[#allocation8 + $0x90] sm:$0xff]
          %v589 = vld [vmem:[#allocation8 + $0x98] sm:$0xff]
          %v590 = vld [vmem:[#allocation8 + $0xa0] sm:$0xff]
          %v591 = vld [vmem:[#allocation8 + $0xa8] sm:$0xff]
          %v592 = vld [vmem:[#allocation8 + $0xb0] sm:$0xff]
          %v593 = vld [vmem:[#allocation8 + $0xb8] sm:$0xff]
          %v594 = vld [vmem:[#allocation8 + $0xc0] sm:$0xff]
          %v595 = vld [vmem:[#allocation8 + $0xc8] sm:$0xff]
          %v596 = vld [vmem:[#allocation8 + $0xd0] sm:$0xff]
          %v597 = vld [vmem:[#allocation8 + $0xd8] sm:$0xff]
          %v598 = vld [vmem:[#allocation8 + $0xe0] sm:$0xff]
          %v599 = vld [vmem:[#allocation8 + $0xe8] sm:$0xff]
          %v600 = vld [vmem:[#allocation8 + $0xf0] sm:$0xff]
          %v601 = vld [vmem:[#allocation8 + $0xf8] sm:$0xff]
          %v602 = vld [vmem:[#allocation8 + $0x100] sm:$0xff]
          %v603 = vld [vmem:[#allocation8 + $0x108] sm:$0xff]
          %v604 = vld [vmem:[#allocation8 + $0x110] sm:$0xff]
          %v605 = vld [vmem:[#allocation8 + $0x118] sm:$0xff]
          %v606 = vld [vmem:[#allocation8 + $0x120] sm:$0xff]
          %v607 = vld [vmem:[#allocation8 + $0x128] sm:$0xff]
          %v608 = vld [vmem:[#allocation8 + $0x130] sm:$0xff]
          %v609 = vld [vmem:[#allocation8 + $0x138] sm:$0xff]
          %v610 = vld [vmem:[#allocation8 + $0x140] sm:$0xff]
          %v611 = vld [vmem:[#allocation8 + $0x148] sm:$0xff]
          %v612 = vld [vmem:[#allocation8 + $0x150] sm:$0xff]
          %v613 = vld [vmem:[#allocation8 + $0x158] sm:$0xff]
          %v614 = vld [vmem:[#allocation8 + $0x160] sm:$0xff]
          %v615 = vld [vmem:[#allocation8 + $0x168] sm:$0xff]
          %v616 = vld [vmem:[#allocation8 + $0x170] sm:$0xff]
          %v617 = vld [vmem:[#allocation8 + $0x178] sm:$0xff]
          %v618 = vld [vmem:[#allocation8 + $0x180] sm:$0xff]
          %v619 = vld [vmem:[#allocation8 + $0x188] sm:$0xff]
          %v620 = vld [vmem:[#allocation8 + $0x190] sm:$0xff]
          %v621 = vld [vmem:[#allocation8 + $0x198] sm:$0xff]
          %v622 = vld [vmem:[#allocation8 + $0x1a0] sm:$0xff]
          %v623 = vld [vmem:[#allocation8 + $0x1a8] sm:$0xff]
          %v624 = vld [vmem:[#allocation8 + $0x1b0] sm:$0xff]
          %v625 = vld [vmem:[#allocation8 + $0x1b8] sm:$0xff]
          %v626 = vld [vmem:[#allocation8 + $0x1c0] sm:$0xff]
          %v627 = vld [vmem:[#allocation8 + $0x1c8] sm:$0xff]
          %v628 = vld [vmem:[#allocation8 + $0x1d0] sm:$0xff]
          %v629 = vld [vmem:[#allocation8 + $0x1d8] sm:$0xff]
          %v630 = vld [vmem:[#allocation8 + $0x1e0] sm:$0xff]
          %v631 = vld [vmem:[#allocation8 + $0x1e8] sm:$0xff]
          %v632 = vld [vmem:[#allocation8 + $0x1f0] sm:$0xff]
          %v633 = vld [vmem:[#allocation8 + $0x1f8] sm:$0xff]
          %v634 = vld [vmem:[%s4] sm:$0xf]
          %v636 = vlaneseq
          %v637 = vshrl.u32 %v636, 7
          %v638 = vsub.s32 0, %v637
          %v639 = vrot.slane %v634, %v638
          %v640 = vlaneseq
          %v641 = vshrl.u32 %v640, 7
          %v642 = vsub.s32 1, %v641
          %v643 = vrot.slane %v634, %v642
          %v644 = vlaneseq
          %v645 = vshrl.u32 %v644, 7
          %v646 = vsub.s32 2, %v645
          %v647 = vrot.slane %v634, %v646
          %v648 = vlaneseq
          %v649 = vshrl.u32 %v648, 7
          %v650 = vsub.s32 3, %v649
          %v651 = vrot.slane %v634, %v650
          %656 = vmatprep.subr.mxu0 %v631
          %657 = vmatpush1.msra.mxu0 %v630
          %658 = vmatprep.subr.mxu0 %v627
          %659 = vmatpush1.msra.mxu0 %v626
          %660 = vmatprep.subr.mxu0 %v623
          %661 = vmatpush1.msra.mxu0 %v622
          %662 = vmatprep.subr.mxu0 %v619
          %663 = vmatpush1.msra.mxu0 %v618
          %664 = vmatprep.subr.mxu0 %v615
          %665 = vmatpush1.msra.mxu0 %v614
          %666 = vmatprep.subr.mxu0 %v611
          %667 = vmatpush1.msra.mxu0 %v610
          %668 = vmatprep.subr.mxu0 %v607
          %669 = vmatpush1.msra.mxu0 %v606
          %670 = vmatprep.subr.mxu0 %v603
          %671 = vmatpush1.msra.mxu0 %v602
          %672 = vmatprep.subr.mxu0 %v599
          %673 = vmatpush1.msra.mxu0 %v598
          %674 = vmatprep.subr.mxu0 %v595
          %675 = vmatpush1.msra.mxu0 %v594
          %676 = vmatprep.subr.mxu0 %v591
          %677 = vmatpush1.msra.mxu0 %v590
          %678 = vmatprep.subr.mxu0 %v587
          %679 = vmatpush1.msra.mxu0 %v586
          %680 = vmatprep.subr.mxu0 %v583
          %681 = vmatpush1.msra.mxu0 %v582
          %682 = vmatprep.subr.mxu0 %v579
          %683 = vmatpush1.msra.mxu0 %v578
          %684 = vmatprep.subr.mxu0 %v575
          %685 = vmatpush1.msra.mxu0 %v574
          %686 = vmatprep.subr.mxu0 %v571
          %687 = vmatpush1.msra.mxu0 %v570
          %688 = vmatprep.subr.mxu0 0.0
          %689 = vmatpush2.msra.mxu0 0.0
          %690 = vmatprep.subr.mxu0 0.0
          %691 = vmatpush2.msra.mxu0 0.0
          %692 = vmatprep.subr.mxu0 0.0
          %693 = vmatpush2.msra.mxu0 0.0
          %694 = vmatprep.subr.mxu0 0.0
          %695 = vmatpush2.msra.mxu0 0.0
          %696 = vmatprep.subr.mxu0 0.0
          %697 = vmatpush2.msra.mxu0 0.0
          %698 = vmatprep.subr.mxu0 0.0
          %699 = vmatpush2.msra.mxu0 0.0
          %700 = vmatprep.subr.mxu0 0.0
          %701 = vmatpush2.msra.mxu0 0.0
          %702 = vmatprep.subr.mxu0 0.0
          %703 = vmatpush2.msra.mxu0 0.0
          %704 = vmatprep.subr.mxu0 0.0
          %705 = vmatpush2.msra.mxu0 0.0
          %706 = vmatprep.subr.mxu0 0.0
          %707 = vmatpush2.msra.mxu0 0.0
          %708 = vmatprep.subr.mxu0 0.0
          %709 = vmatpush2.msra.mxu0 0.0
          %710 = vmatprep.subr.mxu0 0.0
          %711 = vmatpush2.msra.mxu0 0.0
          %712 = vmatprep.subr.mxu0 0.0
          %713 = vmatpush2.msra.mxu0 0.0
          %714 = vmatprep.subr.mxu0 0.0
          %715 = vmatpush2.msra.mxu0 0.0
          %716 = vmatprep.subr.mxu0 0.0
          %717 = vmatpush2.msra.mxu0 0.0
          %718 = vmatprep.subr.mxu0 0.0
          %719 = vmatpush2.msra.mxu0 0.0
          %720 = vmatprep.mubr.f32.mxu0 0.0
          %721 = vmatmul.mubr.f32.gmra.mxu0 %v569
          %v722 = vpop.f32.mrf.mxu0
          %v723 = vadd.f32 %v639, %v722
          %v724 = vpop.f32.mrf.mxu0
          %v725 = vadd.f32 %v643, %v724
          %726 = vdwg.mxu0
          %727 = vmatprep.subr.mxu0 %v633
          %728 = vmatpush1.msra.mxu0 %v632
          %729 = vmatprep.subr.mxu0 %v629
          %730 = vmatpush1.msra.mxu0 %v628
          %731 = vmatprep.subr.mxu0 %v625
          %732 = vmatpush1.msra.mxu0 %v624
          %733 = vmatprep.subr.mxu0 %v621
          %734 = vmatpush1.msra.mxu0 %v620
          %735 = vmatprep.subr.mxu0 %v617
          %736 = vmatpush1.msra.mxu0 %v616
          %737 = vmatprep.subr.mxu0 %v613
          %738 = vmatpush1.msra.mxu0 %v612
          %739 = vmatprep.subr.mxu0 %v609
          %740 = vmatpush1.msra.mxu0 %v608
          %741 = vmatprep.subr.mxu0 %v605
          %742 = vmatpush1.msra.mxu0 %v604
          %743 = vmatprep.subr.mxu0 %v601
          %744 = vmatpush1.msra.mxu0 %v600
          %745 = vmatprep.subr.mxu0 %v597
          %746 = vmatpush1.msra.mxu0 %v596
          %747 = vmatprep.subr.mxu0 %v593
          %748 = vmatpush1.msra.mxu0 %v592
          %749 = vmatprep.subr.mxu0 %v589
          %750 = vmatpush1.msra.mxu0 %v588
          %751 = vmatprep.subr.mxu0 %v585
          %752 = vmatpush1.msra.mxu0 %v584
          %753 = vmatprep.subr.mxu0 %v581
          %754 = vmatpush1.msra.mxu0 %v580
          %755 = vmatprep.subr.mxu0 %v577
          %756 = vmatpush1.msra.mxu0 %v576
          %757 = vmatprep.subr.mxu0 %v573
          %758 = vmatpush1.msra.mxu0 %v572
          %759 = vmatprep.subr.mxu0 0.0
          %760 = vmatpush2.msra.mxu0 0.0
          %761 = vmatprep.subr.mxu0 0.0
          %762 = vmatpush2.msra.mxu0 0.0
          %763 = vmatprep.subr.mxu0 0.0
          %764 = vmatpush2.msra.mxu0 0.0
          %765 = vmatprep.subr.mxu0 0.0
          %766 = vmatpush2.msra.mxu0 0.0
          %767 = vmatprep.subr.mxu0 0.0
          %768 = vmatpush2.msra.mxu0 0.0
          %769 = vmatprep.subr.mxu0 0.0
          %770 = vmatpush2.msra.mxu0 0.0
          %771 = vmatprep.subr.mxu0 0.0
          %772 = vmatpush2.msra.mxu0 0.0
          %773 = vmatprep.subr.mxu0 0.0
          %774 = vmatpush2.msra.mxu0 0.0
          %775 = vmatprep.subr.mxu0 0.0
          %776 = vmatpush2.msra.mxu0 0.0
          %777 = vmatprep.subr.mxu0 0.0
          %778 = vmatpush2.msra.mxu0 0.0
          %779 = vmatprep.subr.mxu0 0.0
          %780 = vmatpush2.msra.mxu0 0.0
          %781 = vmatprep.subr.mxu0 0.0
          %782 = vmatpush2.msra.mxu0 0.0
          %783 = vmatprep.subr.mxu0 0.0
          %784 = vmatpush2.msra.mxu0 0.0
          %785 = vmatprep.subr.mxu0 0.0
          %786 = vmatpush2.msra.mxu0 0.0
          %787 = vmatprep.subr.mxu0 0.0
          %788 = vmatpush2.msra.mxu0 0.0
          %789 = vmatprep.subr.mxu0 0.0
          %790 = vmatpush2.msra.mxu0 0.0
          %791 = vmatprep.mubr.f32.mxu0 0.0
          %792 = vmatmul.mubr.f32.gmra.mxu0 %v569
          %v793 = vpop.f32.mrf.mxu0
          %v794 = vadd.f32 %v647, %v793
          %v795 = vpop.f32.mrf.mxu0
          %v796 = vadd.f32 %v651, %v795
          %797 = vdwg.mxu0
          %v798 = vmul.f32 %v723, 0.5
          %v799 = vmul.f32 %v725, 0.5
          %v800 = vmul.f32 %v794, 0.5
          %v801 = vmul.f32 %v796, 0.5
          %v802 = vtanh.pop %v798
          %v803 = vtanh.pop %v799
          %v804 = vtanh.pop %v800
          %v805 = vtanh.pop %v801
          %v810 = vcombine.low %v802, %v803
          %v811 = vcombine.low %v804, %v805
          %v813 = vunpack.c.l.s4 1966171168
          %v814 = vunpack.c.0.s8 %v813
          %v815 = vlaneseq
          %v816 = vshrl.u32 %v815, 7
          %v817 = vsub.s32 %v814, %v816
          %v818 = vrot.slane %v810, %v817
          %v820 = vunpack.c.l.s4 1966171168
          %v821 = vunpack.c.0.s8 %v820
          %v822 = vlaneseq
          %v823 = vshrl.u32 %v822, 7
          %v824 = vsub.s32 %v821, %v823
          %v825 = vrot.slane %v811, %v824
          %v826 = vcombine.low %v818, %v825
          %v828 = vunpack.c.l.s4 1966171168
          %v829 = vunpack.c.0.s8 %v828
          %v830 = vlaneseq
          %v831 = vshrl.u32 %v830, 7
          %v832 = vsub.s32 %v829, %v831
          %v833 = vrot.slane %v826, %v832
          %v835 = vlaneseq
          %vm836 = vcmp.ge.s32.totalorder %v835, 0
          %vm837 = vcmp.lt.s32.totalorder %v835, 512
          %vm838 = vmand %vm836, %vm837
          %839 = vst.msk [vmem:[#allocation12] sm:$0xf] %vm838, %v833
        $region60: #{tpu_custom_call.1} parent=39 // pred_fallthru
          _
        %s840 = smul.u32 2, %s26
        %p841 = scmp.lt.s32.totalorder %s840, 5
        %s842 = scalar_select %p841, %s840, 5
        %s843 = smul.addr %s842, 8
        %s844 = scalar_lea.vmem %s5, %s843
        // Predicated region
        $region61: #{tpu_custom_call.1} parent=39 // pred_check
          %p845 = pneg %p154
        $region62: #{tpu_custom_call.1} parent=39 // pred_check_branch
          %847 = sbr.rel (%p845) target = $region64
        $region63: #{tpu_custom_call.1} parent=39 // pred_region
          %s848 = smul.u32 2, %s26
        $region64: #{tpu_custom_call.1} parent=39 // pred_fallthru
          _
        // Predicated region
        $region65: #{tpu_custom_call.1} parent=39 // pred_check
          %p849 = pneg %p175
        $region66: #{tpu_custom_call.1} parent=39 // pred_check_branch
          %851 = sbr.rel (%p849) target = $region68
        $region67: #{tpu_custom_call.1} parent=39 // pred_region
          %s853 = ssub.s32 16, 16
          %854 = vsyncadd [#allocation5], %s853
          %s856 = sshll.u32 [#allocation9], 4
          %s857 = int_to_ptr.vmem [resolvable:$true] %s856
          %859 = dma.vmem_to_hbm [thread:$0]  %s857, 16, %s6, [#allocation5]
        $region68: #{tpu_custom_call.1} parent=39 // pred_fallthru
          _
        // Predicated region
        $region69: #{tpu_custom_call.1} parent=39 // pred_check
          %p860 = pneg %p196
        $region70: #{tpu_custom_call.1} parent=39 // pred_check_branch
          %862 = sbr.rel (%p860) target = $region72
        $region71: #{tpu_custom_call.1} parent=39 // pred_region
          %s864 = ssub.s32 16, 16
          %865 = vsyncadd [#allocation11], %s864
          %s867 = sshll.u32 [#allocation10], 4
          %s868 = int_to_ptr.vmem [resolvable:$true] %s867
          %870 = dma.vmem_to_hbm [thread:$0]  %s868, 16, %s7, [#allocation11]
        $region72: #{tpu_custom_call.1} parent=39 // pred_fallthru
          _
        // Predicated region
        $region73: #{tpu_custom_call.1} parent=39 // pred_check
          %p871 = pneg %p217
        $region74: #{tpu_custom_call.1} parent=39 // pred_check_branch
          %873 = sbr.rel (%p871) target = $region76
        $region75: #{tpu_custom_call.1} parent=39 // pred_region
          %s875 = ssub.s32 64, 64
          %876 = vsyncadd [#allocation11], %s875
          %s878 = sshll.u32 [#allocation12], 4
          %s879 = int_to_ptr.vmem [resolvable:$true] %s878
          %881 = dma.vmem_to_hbm [thread:$0]  %s879, 64, %s8, [#allocation11]
        $region76: #{tpu_custom_call.1} parent=39 // pred_fallthru
          _
        // Predicated region
        $region77: #{tpu_custom_call.1} parent=39 // pred_check
          %p882 = pneg %p175
        $region78: #{tpu_custom_call.1} parent=39 // pred_check_branch
          %884 = sbr.rel (%p882) target = $region80
        $region79: #{tpu_custom_call.1} parent=39 // pred_region
          %885 = dma.done [#allocation5], 16
        $region80: #{tpu_custom_call.1} parent=39 // pred_fallthru
          _
        // Predicated region
        $region81: #{tpu_custom_call.1} parent=39 // pred_check
          %p886 = pneg %p196
        $region82: #{tpu_custom_call.1} parent=39 // pred_check_branch
          %888 = sbr.rel (%p886) target = $region84
        $region83: #{tpu_custom_call.1} parent=39 // pred_region
          %889 = dma.done [#allocation11], 16
        $region84: #{tpu_custom_call.1} parent=39 // pred_fallthru
          _
        // Predicated region
        $region85: #{tpu_custom_call.1} parent=39 // pred_check
          %p890 = pneg %p217
        $region86: #{tpu_custom_call.1} parent=39 // pred_check_branch
          %892 = sbr.rel (%p890) target = $region88
        $region87: #{tpu_custom_call.1} parent=39 // pred_region
          %893 = dma.done [#allocation11], 64
        $region88: #{tpu_custom_call.1} parent=39 // pred_fallthru
          _
      $region40: #{tpu_custom_call.1} parent=5 // pred_fallthru
        _
      %p894 = scmp.le.s32.totalorder 2, %s21
      // Predicated region
      $region89: #{tpu_custom_call.1} parent=5 // pred_check
        %p895 = pneg %p894
      $region90: #{tpu_custom_call.1} parent=5 // pred_check_branch
        %897 = sbr.rel (%p895) target = $region92
      $region91: #{tpu_custom_call.1} parent=5 // pred_region
        %s898 = ssub.s32 %s21, 2
        // Predicated region
        $region93: #{tpu_custom_call.1} parent=91 // pred_check
          %p899 = pneg %p160
        $region94: #{tpu_custom_call.1} parent=91 // pred_check_branch
          %901 = sbr.rel (%p899) target = $region96
        $region95: #{tpu_custom_call.1} parent=91 // pred_region
          %s902 = smul.u32 2, %s27
          %p903 = scmp.lt.s32.totalorder %s902, 5
          %s904 = scalar_select %p903, %s902, 5
          %s905 = smul.addr %s904, 8
          %s906 = scalar_lea.vmem %s5, %s905
        $region96: #{tpu_custom_call.1} parent=91 // pred_fallthru
          _
      $region92: #{tpu_custom_call.1} parent=5 // pred_fallthru
        _
    $region6: #{tpu_custom_call.1} parent=1 // loop_footer
      %s25 = sadd.s32 1, %s21
    $region7: #{tpu_custom_call.1} parent=1 // loop_footer_branch
      %20 = sbr.rel target = $region3
    $region8: #{tpu_custom_call.1} parent=1 // loop_exit
      _
    %907 = vsyncpa [#allocation4], 1
    %s908 = scalar_lea.sflag [#allocation4], 1
    %909 = vsyncpa %s908, 1
    %910 = vsyncpa [#allocation7], 1
    %s911 = scalar_lea.sflag [#allocation7], 1
    %912 = vsyncpa %s911, 1
    %913 = vsyncpa [#allocation5], 1
    %s914 = scalar_lea.sflag [#allocation5], 1
    %915 = vsyncpa %s914, 1
    %916 = vsyncpa [#allocation11], 1

</llo_original>
